<compile_context>
chip_gen: v7x
topology: tpu7x:2x2x1
jax: 0.10.0
libtpu: 0.0.40
codegen_flags: <defaults>
</compile_context>

<pallas_src>
import functools

import jax
import jax.numpy as jnp
from jax.experimental import pallas as pl
from jax.experimental.pallas import tpu as pltpu


def _round_up(x, m):
    return (x + m - 1) // m * m


def _se_block_kernel(slab_ref, mask_ref,
                     w1_ref, s1_ref, b1_ref,
                     w2_ref, s2_ref, b2_ref,
                     sew1_ref, sew2_ref,
                     *rest,
                     B, Lpad, Wp, G0, inv_hw, C_in, P, has_ds):
    if has_ds:
        wd_ref, sd_ref, bd_ref, out_ref, h1_ref, stk_ref = rest
    else:
        out_ref, h1_ref, stk_ref = rest

    BL = B * Lpad
    mask = mask_ref[...]                                       # (1, BL) f32

    # ---- conv1 (3x3, stride handled wrapper-side): ONE matmul, K = 9*C_in
    acc1 = jnp.dot(w1_ref[...], slab_ref[0],
                   preferred_element_type=jnp.float32)          # (P, BL) f32
    h1 = jnp.maximum(acc1 * s1_ref[...] + b1_ref[...], 0.0) * mask

    # Stage h1 into the guarded flat buffer.  Only the guard strips are
    # zeroed (per step — never @pl.when(program_id==0): with 'parallel' the
    # second TensorCore's scratch would stay uninitialized).
    h1_ref[:, :G0] = jnp.zeros((P, G0), h1_ref.dtype)
    h1_ref[:, G0 + BL:] = jnp.zeros((P, G0), h1_ref.dtype)
    h1_ref[:, G0:G0 + BL] = h1.astype(h1_ref.dtype)             # lane-aligned

    # ---- conv2 (3x3, stride 1): 9 shifted copies -> ONE matmul, K = 9*P
    for t in range(9):
        dy, dx = t // 3, t % 3
        off = (dy - 1) * Wp + (dx - 1)
        stk_ref[t * P:(t + 1) * P, :] = h1_ref[:, G0 + off:G0 + off + BL]
    acc2 = jnp.dot(w2_ref[...], stk_ref[...],
                   preferred_element_type=jnp.float32)          # (P, BL) f32
    h2 = acc2 * s2_ref[...] + b2_ref[...]                       # bn2

    # ---- SE: per-image GAP -> FC -> ReLU -> FC -> sigmoid (batched over B)
    h2m = h2 * mask
    col = jax.lax.broadcasted_iota(jnp.int32, (P, B), 1)
    pooled = jnp.zeros((P, B), jnp.float32)
    for b in range(B):
        seg = jnp.sum(h2m[:, b * Lpad:(b + 1) * Lpad], axis=1,
                      keepdims=True) * inv_hw                   # (P, 1)
        pooled = pooled + jnp.where(col == b, seg, 0.0)
    z1 = jnp.maximum(jnp.dot(sew1_ref[...], pooled,
                             preferred_element_type=jnp.float32), 0.0)
    z2 = jnp.dot(sew2_ref[...], z1, preferred_element_type=jnp.float32)
    gate = 0.5 * (jnp.tanh(0.5 * z2) + 1.0)                     # sigmoid (P,B)

    # ---- residual: centre tap of the conv1 slab (== strided x)
    xc = slab_ref[0, 4 * C_in:5 * C_in, :]                      # (C_in, BL)
    if has_ds:
        res = (jnp.dot(wd_ref[...], xc, preferred_element_type=jnp.float32)
               * sd_ref[...] + bd_ref[...])
    else:
        res = xc.astype(jnp.float32)

    # ---- gate per image, add residual, final relu; lane-aligned stores
    for b in range(B):
        lo, hi = b * Lpad, (b + 1) * Lpad
        out_ref[0, :, lo:hi] = jnp.maximum(
            h2[:, lo:hi] * gate[:, b:b + 1] + res[:, lo:hi],
            0.0).astype(out_ref.dtype)


def cifar_se_basic_block(x, params, *, stride=1, eps=1e-5,
                         images_per_step=8, compute_dtype=jnp.bfloat16):
    """x: (N, C_in, H, W) f32 -> (N, planes, H//stride, W//stride) f32."""
    N, C_in, H, W = x.shape
    P = params['w1'].shape[0]                    # planes
    assert H % stride == 0 and W % stride == 0
    H_o, W_o = H // stride, W // stride
    Hp, Wp = H_o + 2, W_o + 2                    # padded output grid
    L = Hp * Wp
    Lpad = _round_up(L + Wp + 1, 128)            # per-image lane slot (+tail guard)
    G0 = _round_up(Wp + 1, 128)                  # guard strip in h1 scratch
    has_ds = (C_in != P)
    if not has_ds:
        assert stride == 1, "identity shortcut requires stride == 1"

    # Images per grid step; keep >= 2 grid steps when possible (v7x: 2 TCs).
    B = max(1, min(images_per_step, N if N < 2 else (N + 1) // 2))
    Np = _round_up(N, B)
    G = Np // B
    BL = B * Lpad

    # ----- wrapper-side im2col into the padded flat-grid layout (plumbing) --
    x_p = jnp.pad(x.astype(jnp.float32), ((0, 0), (0, 0), (1, 1), (1, 1)))
    taps = []
    for dy in range(3):
        for dx in range(3):
            taps.append(x_p[:, :, dy::stride, dx::stride][:, :, :H_o, :W_o])
    taps = jnp.stack(taps, axis=1)                   # (N, 9, C, H_o, W_o)
    grid_taps = jnp.zeros((N, 9, C_in, Hp, Wp), jnp.float32)
    grid_taps = grid_taps.at[:, :, :, 1:1 + H_o, 1:1 + W_o].set(taps)
    slab = grid_taps.reshape(N, 9 * C_in, L)
    slab = jnp.pad(slab, ((0, Np - N), (0, 0), (0, Lpad - L)))
    slab = (slab.reshape(G, B, 9 * C_in, Lpad)
                .transpose(0, 2, 1, 3)
                .reshape(G, 9 * C_in, BL)
                .astype(compute_dtype))

    mask1 = (jnp.zeros((Hp, Wp), jnp.float32)
             .at[1:1 + H_o, 1:1 + W_o].set(1.0).reshape(L))
    mask = jnp.tile(jnp.pad(mask1, (0, Lpad - L)), B).reshape(1, BL)

    def bn_fold(g, b, m, v):
        s = g / jnp.sqrt(v + eps)
        return (s.reshape(-1, 1).astype(jnp.float32),
                (b - m * s).reshape(-1, 1).astype(jnp.float32))

    w1s = jnp.transpose(params['w1'], (0, 2, 3, 1)).reshape(P, 9 * C_in)
    w2s = jnp.transpose(params['w2'], (0, 2, 3, 1)).reshape(P, 9 * P)
    w1s = w1s.astype(compute_dtype)
    w2s = w2s.astype(compute_dtype)
    s1, b1 = bn_fold(params['bn1_g'], params['bn1_b'],
                     params['bn1_m'], params['bn1_v'])
    s2, b2 = bn_fold(params['bn2_g'], params['bn2_b'],
                     params['bn2_m'], params['bn2_v'])
    sew1 = params['se_w1'].astype(jnp.float32)       # (P//r, P)
    sew2 = params['se_w2'].astype(jnp.float32)       # (P, P//r)

    def const(r):
        return lambda g: (0,) * r

    args = [slab, mask, w1s, s1, b1, w2s, s2, b2, sew1, sew2]
    in_specs = [
        pl.BlockSpec((1, 9 * C_in, BL), lambda g: (g, 0, 0)),
        pl.BlockSpec((1, BL), const(2)),
        pl.BlockSpec(w1s.shape, const(2)),
        pl.BlockSpec((P, 1), const(2)),
        pl.BlockSpec((P, 1), const(2)),
        pl.BlockSpec(w2s.shape, const(2)),
        pl.BlockSpec((P, 1), const(2)),
        pl.BlockSpec((P, 1), const(2)),
        pl.BlockSpec(sew1.shape, const(2)),
        pl.BlockSpec(sew2.shape, const(2)),
    ]
    if has_ds:
        wd = params['wd'].reshape(P, C_in).astype(compute_dtype)
        sd, bd = bn_fold(params['bnd_g'], params['bnd_b'],
                         params['bnd_m'], params['bnd_v'])
        args += [wd, sd, bd]
        in_specs += [pl.BlockSpec((P, C_in), const(2)),
                     pl.BlockSpec((P, 1), const(2)),
                     pl.BlockSpec((P, 1), const(2))]

    kernel = functools.partial(
        _se_block_kernel, B=B, Lpad=Lpad, Wp=Wp, G0=G0,
        inv_hw=1.0 / float(H_o * W_o), C_in=C_in, P=P, has_ds=has_ds)

    cdb = jnp.dtype(compute_dtype).itemsize
    est = (2 * 9 * C_in * BL * cdb                       # slab, double-buffered
           + 2 * P * BL * 4                              # out, double-buffered
           + (P * (2 * G0 + BL) + 9 * P * BL) * cdb      # VMEM scratch
           + (9 * C_in + 9 * P + 2 * C_in) * P * cdb
           + 8 * P * 4 + BL * 4)
    vmem_limit = int(min(max(3 * est, 16 * 2 ** 20), 48 * 2 ** 20))

    out_flat = pl.pallas_call(
        kernel,
        out_shape=jax.ShapeDtypeStruct((G, P, BL), jnp.float32),
        grid_spec=pltpu.PrefetchScalarGridSpec(
            num_scalar_prefetch=0,
            grid=(G,),
            in_specs=in_specs,
            out_specs=pl.BlockSpec((1, P, BL), lambda g: (g, 0, 0)),
            scratch_shapes=[
                pltpu.VMEM((P, 2 * G0 + BL), compute_dtype),   # guarded h1
                pltpu.VMEM((9 * P, BL), compute_dtype),        # conv2 K-stack
            ]),
        compiler_params=pltpu.CompilerParams(
            dimension_semantics=("parallel",),
            vmem_limit_bytes=vmem_limit),
    )(*args)

    # TODO(synk): when chaining SE blocks, keep this padded (P, Lpad) slab as
    # the block-to-block interchange format instead of de-padding to NCHW.
    out = (out_flat.reshape(G, P, B, Lpad)
                   .transpose(0, 2, 1, 3)
                   .reshape(Np, P, Lpad)[:N, :, :L]
                   .reshape(N, P, Hp, Wp)[:, :, 1:1 + H_o, 1:1 + W_o])
    return out


def _reference(x, params, *, stride, eps=1e-5):
    hi = jax.lax.Precision.HIGHEST

    def conv(x, w, s, pad):
        return jax.lax.conv_general_dilated(
            x, w, (s, s), pad, dimension_numbers=('NCHW', 'OIHW', 'NCHW'),
            precision=hi)

    def bn(y, g, b, m, v):
        s = g / jnp.sqrt(v + eps)
        return y * s[None, :, None, None] + (b - m * s)[None, :, None, None]

    out = jax.nn.relu(bn(conv(x, params['w1'], stride, ((1, 1), (1, 1))),
                         params['bn1_g'], params['bn1_b'],
                         params['bn1_m'], params['bn1_v']))
    out = bn(conv(out, params['w2'], 1, ((1, 1), (1, 1))),
             params['bn2_g'], params['bn2_b'], params['bn2_m'], params['bn2_v'])
    pooled = out.mean(axis=(2, 3))
    z = jax.nn.relu(jnp.dot(pooled, params['se_w1'].T, precision=hi))
    z = jax.nn.sigmoid(jnp.dot(z, params['se_w2'].T, precision=hi))
    out = out * z[:, :, None, None]
    if 'wd' in params:
        res = bn(conv(x, params['wd'], stride, ((0, 0), (0, 0))),
                 params['bnd_g'], params['bnd_b'],
                 params['bnd_m'], params['bnd_v'])
    else:
        res = x
    return jax.nn.relu(out + res)


if __name__ == "__main__":
    key = jax.random.PRNGKey(0)

    def rnd(k, shape, scale=0.2):
        return scale * jax.random.normal(k, shape, dtype=jnp.float32)

    def make_params(key, c_in, planes, reduction, with_ds):
        ks = jax.random.split(key, 16)
        p = dict(
            w1=rnd(ks[1], (planes, c_in, 3, 3)),
            bn1_g=1.0 + 0.1 * jax.random.normal(ks[2], (planes,), jnp.float32),
            bn1_b=rnd(ks[3], (planes,)),
            bn1_m=rnd(ks[4], (planes,)),
            bn1_v=jax.random.uniform(ks[5], (planes,), jnp.float32, 0.5, 1.5),
            w2=rnd(ks[6], (planes, planes, 3, 3)),
            bn2_g=1.0 + 0.1 * jax.random.normal(ks[7], (planes,), jnp.float32),
            bn2_b=rnd(ks[8], (planes,)),
            bn2_m=rnd(ks[9], (planes,)),
            bn2_v=jax.random.uniform(ks[10], (planes,), jnp.float32, 0.5, 1.5),
            se_w1=rnd(ks[11], (planes // reduction, planes)),
            se_w2=rnd(ks[12], (planes, planes // reduction)),
        )
        if with_ds:
            p.update(
                wd=rnd(ks[13], (planes, c_in, 1, 1)),
                bnd_g=1.0 + 0.1 * jax.random.normal(ks[14], (planes,),
                                                    jnp.float32),
                bnd_b=rnd(ks[15], (planes,)),
                bnd_m=jnp.zeros((planes,), jnp.float32),
                bnd_v=jnp.ones((planes,), jnp.float32),
            )
        return p

    k1, k2, kx1, kx2 = jax.random.split(key, 4)

    # ---- config 1: downsample block (C_in != planes, stride 2), N=4 -> 2 steps
    N, C_in, H, W = 4, 4, 16, 16
    planes, stride, reduction = 8, 2, 4
    x = jax.random.normal(kx1, (N, C_in, H, W), dtype=jnp.float32)
    params = make_params(k1, C_in, planes, reduction, True)
    ref = _reference(x, params, stride=stride)

    out_f32 = jax.block_until_ready(
        cifar_se_basic_block(x, params, stride=stride,
                             compute_dtype=jnp.float32))
    assert out_f32.shape == ref.shape, (out_f32.shape, ref.shape)
    err = float(jnp.max(jnp.abs(out_f32 - ref)))
    assert jnp.allclose(out_f32, ref, atol=2e-2, rtol=2e-2), f"f32 err {err}"

    # bf16 MXU operands + f32 accumulation (the v6e/v7x fast path)
    out_bf16 = jax.block_until_ready(
        cifar_se_basic_block(x, params, stride=stride,
                             compute_dtype=jnp.bfloat16))
    err_bf = float(jnp.max(jnp.abs(out_bf16 - ref)))
    assert jnp.allclose(out_bf16, ref, atol=1e-1, rtol=1e-1), f"bf16 err {err_bf}"

    # ---- config 2: identity-shortcut block (C_in == planes, stride 1)
    N2, C2, H2 = 4, 8, 8
    x2 = jax.random.normal(kx2, (N2, C2, H2, H2), dtype=jnp.float32)
    params2 = make_params(k2, C2, C2, 4, False)
    ref2 = _reference(x2, params2, stride=1)
    out2 = jax.block_until_ready(
        cifar_se_basic_block(x2, params2, stride=1,
                             compute_dtype=jnp.float32))
    err2 = float(jnp.max(jnp.abs(out2 - ref2)))
    assert jnp.allclose(out2, ref2, atol=2e-2, rtol=2e-2), f"identity err {err2}"

    print("KERNEL_OK")
</pallas_src>

<mosaic_0001>
module attributes {stable_mosaic.version = 11 : i64} {
  func.func @_se_block_kernel(%arg0: i32, %arg1: memref<1x36x256xf32, #tpu.memory_space<vmem>>, %arg2: memref<1x256xf32, #tpu.memory_space<vmem>>, %arg3: memref<8x36xf32, #tpu.memory_space<vmem>>, %arg4: memref<8x1xf32, #tpu.memory_space<vmem>>, %arg5: memref<8x1xf32, #tpu.memory_space<vmem>>, %arg6: memref<8x72xf32, #tpu.memory_space<vmem>>, %arg7: memref<8x1xf32, #tpu.memory_space<vmem>>, %arg8: memref<8x1xf32, #tpu.memory_space<vmem>>, %arg9: memref<2x8xf32, #tpu.memory_space<vmem>>, %arg10: memref<8x2xf32, #tpu.memory_space<vmem>>, %arg11: memref<8x4xf32, #tpu.memory_space<vmem>>, %arg12: memref<8x1xf32, #tpu.memory_space<vmem>>, %arg13: memref<8x1xf32, #tpu.memory_space<vmem>>, %arg14: memref<1x8x256xf32, #tpu.memory_space<vmem>>, %arg15: memref<8x512xf32, #tpu.memory_space<vmem>>, %arg16: memref<72x256xf32, #tpu.memory_space<vmem>>) attributes {dimension_semantics = [#tpu.dimension_semantics<parallel>], iteration_bounds = array<i64: 2>, scalar_prefetch = 0 : i64, scratch_operands = 2 : i64, tpu.core_type = #tpu.core_type<tc>, window_params = [{transform_indices = @transform_0, window_bounds = array<i64: 1, 36, 256>}, {pipeline_mode = #tpu.pipeline_mode<synchronous>, transform_indices = @transform_1, window_bounds = array<i64: 1, 256>}, {pipeline_mode = #tpu.pipeline_mode<synchronous>, transform_indices = @transform_2, window_bounds = array<i64: 8, 36>}, {pipeline_mode = #tpu.pipeline_mode<synchronous>, transform_indices = @transform_3, window_bounds = array<i64: 8, 1>}, {pipeline_mode = #tpu.pipeline_mode<synchronous>, transform_indices = @transform_4, window_bounds = array<i64: 8, 1>}, {pipeline_mode = #tpu.pipeline_mode<synchronous>, transform_indices = @transform_5, window_bounds = array<i64: 8, 72>}, {pipeline_mode = #tpu.pipeline_mode<synchronous>, transform_indices = @transform_6, window_bounds = array<i64: 8, 1>}, {pipeline_mode = #tpu.pipeline_mode<synchronous>, transform_indices = @transform_7, window_bounds = array<i64: 8, 1>}, {pipeline_mode = #tpu.pipeline_mode<synchronous>, transform_indices = @transform_8, window_bounds = array<i64: 2, 8>}, {pipeline_mode = #tpu.pipeline_mode<synchronous>, transform_indices = @transform_9, window_bounds = array<i64: 8, 2>}, {pipeline_mode = #tpu.pipeline_mode<synchronous>, transform_indices = @transform_10, window_bounds = array<i64: 8, 4>}, {pipeline_mode = #tpu.pipeline_mode<synchronous>, transform_indices = @transform_11, window_bounds = array<i64: 8, 1>}, {pipeline_mode = #tpu.pipeline_mode<synchronous>, transform_indices = @transform_12, window_bounds = array<i64: 8, 1>}, {transform_indices = @transform_13, window_bounds = array<i64: 1, 8, 256>}]} {
    %c0 = arith.constant 0 : index
    %c0_0 = arith.constant 0 : index
    %0 = vector.load %arg2[%c0, %c0_0] : memref<1x256xf32, #tpu.memory_space<vmem>>, vector<1x256xf32>
    %c0_1 = arith.constant 0 : index
    %c0_2 = arith.constant 0 : index
    %1 = vector.load %arg3[%c0_1, %c0_2] : memref<8x36xf32, #tpu.memory_space<vmem>>, vector<8x36xf32>
    %c0_3 = arith.constant 0 : index
    %c0_4 = arith.constant 0 : index
    %c0_5 = arith.constant 0 : index
    %2 = vector.load %arg1[%c0_3, %c0_4, %c0_5] : memref<1x36x256xf32, #tpu.memory_space<vmem>>, vector<1x36x256xf32>
    %3 = vector.shape_cast %2 : vector<1x36x256xf32> to vector<36x256xf32>
    %cst = arith.constant dense<0.000000e+00> : vector<8x256xf32>
    %4 = tpu.matmul %1, %3, %cst {dimension_numbers = #tpu.dot_dimension_numbers<[1], [0], [0], [1], [0, 0, 1, 1], [], []>} : vector<8x36xf32>, vector<36x256xf32>, vector<8x256xf32> -> vector<8x256xf32>
    %c0_6 = arith.constant 0 : index
    %c0_7 = arith.constant 0 : index
    %5 = vector.load %arg4[%c0_6, %c0_7] : memref<8x1xf32, #tpu.memory_space<vmem>>, vector<8x1xf32>
    %6 = vector.broadcast %5 : vector<8x1xf32> to vector<8x256xf32>
    %7 = arith.mulf %4, %6 : vector<8x256xf32>
    %c0_8 = arith.constant 0 : index
    %c0_9 = arith.constant 0 : index
    %8 = vector.load %arg5[%c0_8, %c0_9] : memref<8x1xf32, #tpu.memory_space<vmem>>, vector<8x1xf32>
    %9 = vector.broadcast %8 : vector<8x1xf32> to vector<8x256xf32>
    %10 = arith.addf %7, %9 : vector<8x256xf32>
    %cst_10 = arith.constant 0.000000e+00 : f32
    %11 = vector.broadcast %cst_10 : f32 to vector<8x256xf32>
    %12 = arith.maximumf %10, %11 : vector<8x256xf32>
    %13 = vector.broadcast %0 : vector<1x256xf32> to vector<8x256xf32>
    %14 = arith.mulf %12, %13 : vector<8x256xf32>
    %cst_11 = arith.constant 0.000000e+00 : f32
    %15 = vector.broadcast %cst_11 : f32 to vector<8x128xf32>
    %c0_12 = arith.constant 0 : index
    %c0_13 = arith.constant 0 : index
    %16 = vector.load %arg15[%c0_12, %c0_13] : memref<8x512xf32, #tpu.memory_space<vmem>>, vector<8x128xf32>
    tpu.vector_store %arg15[%c0_12, %c0_13], %15 {strides = array<i32>} : memref<8x512xf32, #tpu.memory_space<vmem>>, vector<8x128xf32>,
    %cst_14 = arith.constant 0.000000e+00 : f32
    %17 = vector.broadcast %cst_14 : f32 to vector<8x128xf32>
    %c0_15 = arith.constant 0 : index
    %c384 = arith.constant 384 : index
    %18 = vector.load %arg15[%c0_15, %c384] : memref<8x512xf32, #tpu.memory_space<vmem>>, vector<8x128xf32>
    tpu.vector_store %arg15[%c0_15, %c384], %17 {strides = array<i32>} : memref<8x512xf32, #tpu.memory_space<vmem>>, vector<8x128xf32>,
    %c0_16 = arith.constant 0 : index
    %c128 = arith.constant 128 : index
    %19 = vector.load %arg15[%c0_16, %c128] : memref<8x512xf32, #tpu.memory_space<vmem>>, vector<8x256xf32>
    tpu.vector_store %arg15[%c0_16, %c128], %14 {strides = array<i32>} : memref<8x512xf32, #tpu.memory_space<vmem>>, vector<8x256xf32>,
    %c0_17 = arith.constant 0 : index
    %c117 = arith.constant 117 : index
    %20 = vector.load %arg15[%c0_17, %c117] : memref<8x512xf32, #tpu.memory_space<vmem>>, vector<8x256xf32>
    %c0_18 = arith.constant 0 : index
    %c0_19 = arith.constant 0 : index
    %21 = vector.load %arg16[%c0_18, %c0_19] : memref<72x256xf32, #tpu.memory_space<vmem>>, vector<8x256xf32>
    tpu.vector_store %arg16[%c0_18, %c0_19], %20 {strides = array<i32>} : memref<72x256xf32, #tpu.memory_space<vmem>>, vector<8x256xf32>,
    %c0_20 = arith.constant 0 : index
    %c118 = arith.constant 118 : index
    %22 = vector.load %arg15[%c0_20, %c118] : memref<8x512xf32, #tpu.memory_space<vmem>>, vector<8x256xf32>
    %c8 = arith.constant 8 : index
    %c0_21 = arith.constant 0 : index
    %23 = vector.load %arg16[%c8, %c0_21] : memref<72x256xf32, #tpu.memory_space<vmem>>, vector<8x256xf32>
    tpu.vector_store %arg16[%c8, %c0_21], %22 {strides = array<i32>} : memref<72x256xf32, #tpu.memory_space<vmem>>, vector<8x256xf32>,
    %c0_22 = arith.constant 0 : index
    %c119 = arith.constant 119 : index
    %24 = vector.load %arg15[%c0_22, %c119] : memref<8x512xf32, #tpu.memory_space<vmem>>, vector<8x256xf32>
    %c16 = arith.constant 16 : index
    %c0_23 = arith.constant 0 : index
    %25 = vector.load %arg16[%c16, %c0_23] : memref<72x256xf32, #tpu.memory_space<vmem>>, vector<8x256xf32>
    tpu.vector_store %arg16[%c16, %c0_23], %24 {strides = array<i32>} : memref<72x256xf32, #tpu.memory_space<vmem>>, vector<8x256xf32>,
    %c0_24 = arith.constant 0 : index
    %c127 = arith.constant 127 : index
    %26 = vector.load %arg15[%c0_24, %c127] : memref<8x512xf32, #tpu.memory_space<vmem>>, vector<8x256xf32>
    %c24 = arith.constant 24 : index
    %c0_25 = arith.constant 0 : index
    %27 = vector.load %arg16[%c24, %c0_25] : memref<72x256xf32, #tpu.memory_space<vmem>>, vector<8x256xf32>
    tpu.vector_store %arg16[%c24, %c0_25], %26 {strides = array<i32>} : memref<72x256xf32, #tpu.memory_space<vmem>>, vector<8x256xf32>,
    %c0_26 = arith.constant 0 : index
    %c128_27 = arith.constant 128 : index
    %28 = vector.load %arg15[%c0_26, %c128_27] : memref<8x512xf32, #tpu.memory_space<vmem>>, vector<8x256xf32>
    %c32 = arith.constant 32 : index
    %c0_28 = arith.constant 0 : index
    %29 = vector.load %arg16[%c32, %c0_28] : memref<72x256xf32, #tpu.memory_space<vmem>>, vector<8x256xf32>
    tpu.vector_store %arg16[%c32, %c0_28], %28 {strides = array<i32>} : memref<72x256xf32, #tpu.memory_space<vmem>>, vector<8x256xf32>,
    %c0_29 = arith.constant 0 : index
    %c129 = arith.constant 129 : index
    %30 = vector.load %arg15[%c0_29, %c129] : memref<8x512xf32, #tpu.memory_space<vmem>>, vector<8x256xf32>
    %c40 = arith.constant 40 : index
    %c0_30 = arith.constant 0 : index
    %31 = vector.load %arg16[%c40, %c0_30] : memref<72x256xf32, #tpu.memory_space<vmem>>, vector<8x256xf32>
    tpu.vector_store %arg16[%c40, %c0_30], %30 {strides = array<i32>} : memref<72x256xf32, #tpu.memory_space<vmem>>, vector<8x256xf32>,
    %c0_31 = arith.constant 0 : index
    %c137 = arith.constant 137 : index
    %32 = vector.load %arg15[%c0_31, %c137] : memref<8x512xf32, #tpu.memory_space<vmem>>, vector<8x256xf32>
    %c48 = arith.constant 48 : index
    %c0_32 = arith.constant 0 : index
    %33 = vector.load %arg16[%c48, %c0_32] : memref<72x256xf32, #tpu.memory_space<vmem>>, vector<8x256xf32>
    tpu.vector_store %arg16[%c48, %c0_32], %32 {strides = array<i32>} : memref<72x256xf32, #tpu.memory_space<vmem>>, vector<8x256xf32>,
    %c0_33 = arith.constant 0 : index
    %c138 = arith.constant 138 : index
    %34 = vector.load %arg15[%c0_33, %c138] : memref<8x512xf32, #tpu.memory_space<vmem>>, vector<8x256xf32>
    %c56 = arith.constant 56 : index
    %c0_34 = arith.constant 0 : index
    %35 = vector.load %arg16[%c56, %c0_34] : memref<72x256xf32, #tpu.memory_space<vmem>>, vector<8x256xf32>
    tpu.vector_store %arg16[%c56, %c0_34], %34 {strides = array<i32>} : memref<72x256xf32, #tpu.memory_space<vmem>>, vector<8x256xf32>,
    %c0_35 = arith.constant 0 : index
    %c139 = arith.constant 139 : index
    %36 = vector.load %arg15[%c0_35, %c139] : memref<8x512xf32, #tpu.memory_space<vmem>>, vector<8x256xf32>
    %c64 = arith.constant 64 : index
    %c0_36 = arith.constant 0 : index
    %37 = vector.load %arg16[%c64, %c0_36] : memref<72x256xf32, #tpu.memory_space<vmem>>, vector<8x256xf32>
    tpu.vector_store %arg16[%c64, %c0_36], %36 {strides = array<i32>} : memref<72x256xf32, #tpu.memory_space<vmem>>, vector<8x256xf32>,
    %c0_37 = arith.constant 0 : index
    %c0_38 = arith.constant 0 : index
    %38 = vector.load %arg6[%c0_37, %c0_38] : memref<8x72xf32, #tpu.memory_space<vmem>>, vector<8x72xf32>
    %c0_39 = arith.constant 0 : index
    %c0_40 = arith.constant 0 : index
    %39 = vector.load %arg16[%c0_39, %c0_40] : memref<72x256xf32, #tpu.memory_space<vmem>>, vector<72x256xf32>
    %cst_41 = arith.constant dense<0.000000e+00> : vector<8x256xf32>
    %40 = tpu.matmul %38, %39, %cst_41 {dimension_numbers = #tpu.dot_dimension_numbers<[1], [0], [0], [1], [0, 0, 1, 1], [], []>} : vector<8x72xf32>, vector<72x256xf32>, vector<8x256xf32> -> vector<8x256xf32>
    %c0_42 = arith.constant 0 : index
    %c0_43 = arith.constant 0 : index
    %41 = vector.load %arg7[%c0_42, %c0_43] : memref<8x1xf32, #tpu.memory_space<vmem>>, vector<8x1xf32>
    %42 = vector.broadcast %41 : vector<8x1xf32> to vector<8x256xf32>
    %43 = arith.mulf %40, %42 : vector<8x256xf32>
    %c0_44 = arith.constant 0 : index
    %c0_45 = arith.constant 0 : index
    %44 = vector.load %arg8[%c0_44, %c0_45] : memref<8x1xf32, #tpu.memory_space<vmem>>, vector<8x1xf32>
    %45 = vector.broadcast %44 : vector<8x1xf32> to vector<8x256xf32>
    %46 = arith.addf %43, %45 : vector<8x256xf32>
    %47 = vector.broadcast %0 : vector<1x256xf32> to vector<8x256xf32>
    %48 = arith.mulf %46, %47 : vector<8x256xf32>
    %49 = tpu.iota {dimensions = array<i32: 1>} : vector<8x2xi32>
    %cst_46 = arith.constant 0.000000e+00 : f32
    %50 = vector.broadcast %cst_46 : f32 to vector<8x2xf32>
    %51 = vector.extract_strided_slice %48 {offsets = [0, 0], sizes = [8, 128], strides = [1, 1]} : vector<8x256xf32> to vector<8x128xf32>
    %cst_47 = arith.constant dense<0.000000e+00> : vector<8xf32>
    %52 = vector.multi_reduction <add>, %51, %cst_47 [1] : vector<8x128xf32> to vector<8xf32>
    %53 = vector.shape_cast %52 : vector<8xf32> to vector<8x1xf32>
    %cst_48 = arith.constant 1.562500e-02 : f32
    %54 = vector.broadcast %cst_48 : f32 to vector<8x1xf32>
    %55 = arith.mulf %53, %54 : vector<8x1xf32>
    %c0_i32 = arith.constant 0 : i32
    %56 = vector.broadcast %c0_i32 : i32 to vector<8x2xi32>
    %57 = arith.cmpi eq, %49, %56 : vector<8x2xi32>
    %cst_49 = arith.constant 0.000000e+00 : f32
    %58 = vector.shape_cast %55 : vector<8x1xf32> to vector<8x1xf32>
    %59 = vector.broadcast %58 : vector<8x1xf32> to vector<8x2xf32>
    %60 = vector.broadcast %cst_49 : f32 to vector<8x2xf32>
    %61 = arith.select %57, %59, %60 : vector<8x2xi1>, vector<8x2xf32>
    %62 = arith.addf %50, %61 : vector<8x2xf32>
    %63 = vector.extract_strided_slice %48 {offsets = [0, 128], sizes = [8, 128], strides = [1, 1]} : vector<8x256xf32> to vector<8x128xf32>
    %cst_50 = arith.constant dense<0.000000e+00> : vector<8xf32>
    %64 = vector.multi_reduction <add>, %63, %cst_50 [1] : vector<8x128xf32> to vector<8xf32>
    %65 = vector.shape_cast %64 : vector<8xf32> to vector<8x1xf32>
    %cst_51 = arith.constant 1.562500e-02 : f32
    %66 = vector.broadcast %cst_51 : f32 to vector<8x1xf32>
    %67 = arith.mulf %65, %66 : vector<8x1xf32>
    %c1_i32 = arith.constant 1 : i32
    %68 = vector.broadcast %c1_i32 : i32 to vector<8x2xi32>
    %69 = arith.cmpi eq, %49, %68 : vector<8x2xi32>
    %cst_52 = arith.constant 0.000000e+00 : f32
    %70 = vector.shape_cast %67 : vector<8x1xf32> to vector<8x1xf32>
    %71 = vector.broadcast %70 : vector<8x1xf32> to vector<8x2xf32>
    %72 = vector.broadcast %cst_52 : f32 to vector<8x2xf32>
    %73 = arith.select %69, %71, %72 : vector<8x2xi1>, vector<8x2xf32>
    %74 = arith.addf %62, %73 : vector<8x2xf32>
    %c0_53 = arith.constant 0 : index
    %c0_54 = arith.constant 0 : index
    %75 = vector.load %arg9[%c0_53, %c0_54] : memref<2x8xf32, #tpu.memory_space<vmem>>, vector<2x8xf32>
    %cst_55 = arith.constant dense<0.000000e+00> : vector<2x2xf32>
    %76 = tpu.matmul %75, %74, %cst_55 {dimension_numbers = #tpu.dot_dimension_numbers<[1], [0], [0], [1], [0, 0, 1, 1], [], []>} : vector<2x8xf32>, vector<8x2xf32>, vector<2x2xf32> -> vector<2x2xf32>
    %cst_56 = arith.constant 0.000000e+00 : f32
    %77 = vector.broadcast %cst_56 : f32 to vector<2x2xf32>
    %78 = arith.maximumf %76, %77 : vector<2x2xf32>
    %c0_57 = arith.constant 0 : index
    %c0_58 = arith.constant 0 : index
    %79 = vector.load %arg10[%c0_57, %c0_58] : memref<8x2xf32, #tpu.memory_space<vmem>>, vector<8x2xf32>
    %cst_59 = arith.constant dense<0.000000e+00> : vector<8x2xf32>
    %80 = tpu.matmul %79, %78, %cst_59 {dimension_numbers = #tpu.dot_dimension_numbers<[1], [0], [0], [1], [0, 0, 1, 1], [], []>} : vector<8x2xf32>, vector<2x2xf32>, vector<8x2xf32> -> vector<8x2xf32>
    %cst_60 = arith.constant 5.000000e-01 : f32
    %81 = vector.broadcast %cst_60 : f32 to vector<8x2xf32>
    %82 = arith.mulf %81, %80 : vector<8x2xf32>
    %83 = math.tanh %82 : vector<8x2xf32>
    %cst_61 = arith.constant 1.000000e+00 : f32
    %84 = vector.broadcast %cst_61 : f32 to vector<8x2xf32>
    %85 = arith.addf %83, %84 : vector<8x2xf32>
    %cst_62 = arith.constant 5.000000e-01 : f32
    %86 = vector.broadcast %cst_62 : f32 to vector<8x2xf32>
    %87 = arith.mulf %86, %85 : vector<8x2xf32>
    %c0_63 = arith.constant 0 : index
    %c16_64 = arith.constant 16 : index
    %c0_65 = arith.constant 0 : index
    %88 = vector.load %arg1[%c0_63, %c16_64, %c0_65] : memref<1x36x256xf32, #tpu.memory_space<vmem>>, vector<1x4x256xf32>
    %89 = vector.shape_cast %88 : vector<1x4x256xf32> to vector<4x256xf32>
    %c0_66 = arith.constant 0 : index
    %c0_67 = arith.constant 0 : index
    %90 = vector.load %arg11[%c0_66, %c0_67] : memref<8x4xf32, #tpu.memory_space<vmem>>, vector<8x4xf32>
    %cst_68 = arith.constant dense<0.000000e+00> : vector<8x256xf32>
    %91 = tpu.matmul %90, %89, %cst_68 {dimension_numbers = #tpu.dot_dimension_numbers<[1], [0], [0], [1], [0, 0, 1, 1], [], []>} : vector<8x4xf32>, vector<4x256xf32>, vector<8x256xf32> -> vector<8x256xf32>
    %c0_69 = arith.constant 0 : index
    %c0_70 = arith.constant 0 : index
    %92 = vector.load %arg12[%c0_69, %c0_70] : memref<8x1xf32, #tpu.memory_space<vmem>>, vector<8x1xf32>
    %93 = vector.broadcast %92 : vector<8x1xf32> to vector<8x256xf32>
    %94 = arith.mulf %91, %93 : vector<8x256xf32>
    %c0_71 = arith.constant 0 : index
    %c0_72 = arith.constant 0 : index
    %95 = vector.load %arg13[%c0_71, %c0_72] : memref<8x1xf32, #tpu.memory_space<vmem>>, vector<8x1xf32>
    %96 = vector.broadcast %95 : vector<8x1xf32> to vector<8x256xf32>
    %97 = arith.addf %94, %96 : vector<8x256xf32>
    %98 = vector.extract_strided_slice %46 {offsets = [0, 0], sizes = [8, 128], strides = [1, 1]} : vector<8x256xf32> to vector<8x128xf32>
    %99 = vector.extract_strided_slice %87 {offsets = [0, 0], sizes = [8, 1], strides = [1, 1]} : vector<8x2xf32> to vector<8x1xf32>
    %100 = vector.broadcast %99 : vector<8x1xf32> to vector<8x128xf32>
    %101 = arith.mulf %98, %100 : vector<8x128xf32>
    %102 = vector.extract_strided_slice %97 {offsets = [0, 0], sizes = [8, 128], strides = [1, 1]} : vector<8x256xf32> to vector<8x128xf32>
    %103 = arith.addf %101, %102 : vector<8x128xf32>
    %cst_73 = arith.constant 0.000000e+00 : f32
    %104 = vector.broadcast %cst_73 : f32 to vector<8x128xf32>
    %105 = arith.maximumf %103, %104 : vector<8x128xf32>
    %c0_74 = arith.constant 0 : index
    %c0_75 = arith.constant 0 : index
    %c0_76 = arith.constant 0 : index
    %106 = vector.load %arg14[%c0_74, %c0_75, %c0_76] : memref<1x8x256xf32, #tpu.memory_space<vmem>>, vector<1x8x128xf32>
    %107 = vector.shape_cast %106 : vector<1x8x128xf32> to vector<8x128xf32>
    %108 = vector.shape_cast %105 : vector<8x128xf32> to vector<1x8x128xf32>
    tpu.vector_store %arg14[%c0_74, %c0_75, %c0_76], %108 {strides = array<i32>} : memref<1x8x256xf32, #tpu.memory_space<vmem>>, vector<1x8x128xf32>,
    %109 = vector.extract_strided_slice %46 {offsets = [0, 128], sizes = [8, 128], strides = [1, 1]} : vector<8x256xf32> to vector<8x128xf32>
    %110 = vector.extract_strided_slice %87 {offsets = [0, 1], sizes = [8, 1], strides = [1, 1]} : vector<8x2xf32> to vector<8x1xf32>
    %111 = vector.broadcast %110 : vector<8x1xf32> to vector<8x128xf32>
    %112 = arith.mulf %109, %111 : vector<8x128xf32>
    %113 = vector.extract_strided_slice %97 {offsets = [0, 128], sizes = [8, 128], strides = [1, 1]} : vector<8x256xf32> to vector<8x128xf32>
    %114 = arith.addf %112, %113 : vector<8x128xf32>
    %cst_77 = arith.constant 0.000000e+00 : f32
    %115 = vector.broadcast %cst_77 : f32 to vector<8x128xf32>
    %116 = arith.maximumf %114, %115 : vector<8x128xf32>
    %c0_78 = arith.constant 0 : index
    %c0_79 = arith.constant 0 : index
    %c128_80 = arith.constant 128 : index
    %117 = vector.load %arg14[%c0_78, %c0_79, %c128_80] : memref<1x8x256xf32, #tpu.memory_space<vmem>>, vector<1x8x128xf32>
    %118 = vector.shape_cast %117 : vector<1x8x128xf32> to vector<8x128xf32>
    %119 = vector.shape_cast %116 : vector<8x128xf32> to vector<1x8x128xf32>
    tpu.vector_store %arg14[%c0_78, %c0_79, %c128_80], %119 {strides = array<i32>} : memref<1x8x256xf32, #tpu.memory_space<vmem>>, vector<1x8x128xf32>,
    return
  }
  func.func @transform_0(%arg0: i32) -> (i32, i32, i32) {
    %c0_i32 = arith.constant 0 : i32
    %c0_i32_0 = arith.constant 0 : i32
    %c0_i32_1 = arith.constant 0 : i32
    return %arg0, %c0_i32, %c0_i32_0 : i32, i32, i32
  }
  func.func @transform_1(%arg0: i32) -> (i32, i32) {
    %c0_i32 = arith.constant 0 : i32
    %c0_i32_0 = arith.constant 0 : i32
    %c0_i32_1 = arith.constant 0 : i32
    return %c0_i32, %c0_i32_0 : i32, i32
  }
  func.func @transform_2(%arg0: i32) -> (i32, i32) {
    %c0_i32 = arith.constant 0 : i32
    %c0_i32_0 = arith.constant 0 : i32
    %c0_i32_1 = arith.constant 0 : i32
    return %c0_i32, %c0_i32_0 : i32, i32
  }
  func.func @transform_3(%arg0: i32) -> (i32, i32) {
    %c0_i32 = arith.constant 0 : i32
    %c0_i32_0 = arith.constant 0 : i32
    %c0_i32_1 = arith.constant 0 : i32
    return %c0_i32, %c0_i32_0 : i32, i32
  }
  func.func @transform_4(%arg0: i32) -> (i32, i32) {
    %c0_i32 = arith.constant 0 : i32
    %c0_i32_0 = arith.constant 0 : i32
    %c0_i32_1 = arith.constant 0 : i32
    return %c0_i32, %c0_i32_0 : i32, i32
  }
  func.func @transform_5(%arg0: i32) -> (i32, i32) {
    %c0_i32 = arith.constant 0 : i32
    %c0_i32_0 = arith.constant 0 : i32
    %c0_i32_1 = arith.constant 0 : i32
    return %c0_i32, %c0_i32_0 : i32, i32
  }
  func.func @transform_6(%arg0: i32) -> (i32, i32) {
    %c0_i32 = arith.constant 0 : i32
    %c0_i32_0 = arith.constant 0 : i32
    %c0_i32_1 = arith.constant 0 : i32
    return %c0_i32, %c0_i32_0 : i32, i32
  }
  func.func @transform_7(%arg0: i32) -> (i32, i32) {
    %c0_i32 = arith.constant 0 : i32
    %c0_i32_0 = arith.constant 0 : i32
    %c0_i32_1 = arith.constant 0 : i32
    return %c0_i32, %c0_i32_0 : i32, i32
  }
  func.func @transform_8(%arg0: i32) -> (i32, i32) {
    %c0_i32 = arith.constant 0 : i32
    %c0_i32_0 = arith.constant 0 : i32
    %c0_i32_1 = arith.constant 0 : i32
    return %c0_i32, %c0_i32_0 : i32, i32
  }
  func.func @transform_9(%arg0: i32) -> (i32, i32) {
    %c0_i32 = arith.constant 0 : i32
    %c0_i32_0 = arith.constant 0 : i32
    %c0_i32_1 = arith.constant 0 : i32
    return %c0_i32, %c0_i32_0 : i32, i32
  }
  func.func @transform_10(%arg0: i32) -> (i32, i32) {
    %c0_i32 = arith.constant 0 : i32
    %c0_i32_0 = arith.constant 0 : i32
    %c0_i32_1 = arith.constant 0 : i32
    return %c0_i32, %c0_i32_0 : i32, i32
  }
  func.func @transform_11(%arg0: i32) -> (i32, i32) {
    %c0_i32 = arith.constant 0 : i32
    %c0_i32_0 = arith.constant 0 : i32
    %c0_i32_1 = arith.constant 0 : i32
    return %c0_i32, %c0_i32_0 : i32, i32
  }
  func.func @transform_12(%arg0: i32) -> (i32, i32) {
    %c0_i32 = arith.constant 0 : i32
    %c0_i32_0 = arith.constant 0 : i32
    %c0_i32_1 = arith.constant 0 : i32
    return %c0_i32, %c0_i32_0 : i32, i32
  }
  func.func @transform_13(%arg0: i32) -> (i32, i32, i32) {
    %c0_i32 = arith.constant 0 : i32
    %c0_i32_0 = arith.constant 0 : i32
    %c0_i32_1 = arith.constant 0 : i32
    return %arg0, %c0_i32, %c0_i32_0 : i32, i32, i32
  }
}

</mosaic_0001>

<llo_original>
// kernel: tpu_custom_call.1
$region0: #{tpu_custom_call.1}
  #allocation0 [shape = 'u32[]', space=smem, size = 0x4, offset = 0x4, fixed_abs, tag = 'smem constant byte address 0x4 - core index']
  #allocation1 [shape = 'u32[144,128]{1,0:T(1,128)}', space=vmem, size = 0x12000, scoped, tag = 'internal scratch']
  #allocation2 [shape = 'f32[8,512]{1,0:T(8,128)}', space=vmem, size = 0x4000, scoped, tag = 'scratch operand']
  #allocation3 [shape = 'f32[72,256]{1,0:T(8,128)}', space=vmem, size = 0x12000, scoped, tag = 'scratch operand']
  %s0 = inlined_call_operand.vmem [shape: f32[2,36,256], index: 0, kind: input, shape index: {}]
  %s1 = inlined_call_operand.vmem [shape: f32[1,256], index: 1, kind: input, shape index: {}]
  %s2 = inlined_call_operand.vmem [shape: f32[8,36], index: 2, kind: input, shape index: {}]
  %s3 = inlined_call_operand.vmem [shape: f32[8,1], index: 3, kind: input, shape index: {}]
  %s4 = inlined_call_operand.vmem [shape: f32[8,1], index: 4, kind: input, shape index: {}]
  %s5 = inlined_call_operand.vmem [shape: f32[8,72], index: 5, kind: input, shape index: {}]
  %s6 = inlined_call_operand.vmem [shape: f32[8,1], index: 6, kind: input, shape index: {}]
  %s7 = inlined_call_operand.vmem [shape: f32[8,1], index: 7, kind: input, shape index: {}]
  %s8 = inlined_call_operand.vmem [shape: f32[2,8], index: 8, kind: input, shape index: {}]
  %s9 = inlined_call_operand.vmem [shape: f32[8,2], index: 9, kind: input, shape index: {}]
  %s10 = inlined_call_operand.vmem [shape: f32[8,4], index: 10, kind: input, shape index: {}]
  %s11 = inlined_call_operand.vmem [shape: f32[8,1], index: 11, kind: input, shape index: {}]
  %s12 = inlined_call_operand.vmem [shape: f32[8,1], index: 12, kind: input, shape index: {}]
  %s13 = inlined_call_operand.hbm [shape: f32[2,8,256], index: 13, kind: output, shape index: {}]
  %s14 = sld [smem:[#allocation0]]
  $region85: #{tpu_custom_call.1} parent=0
    _
  %s16 = ssub.s32 1, %s14
  %s17 = scalar_select 0, %s16, %s14
  $region1: #{tpu_custom_call.1} parent=0
    #allocation4 [shape = 'u8[16384]{0}', space=vmem, size = 0x4000, scoped, tag = 'output window, operand 0']
    #allocation5 [shape = 's32[2]{0}', space=sflag, size = 0x8, scoped, tag = 'scoped memory for tpu_custom_call.1']
    %18 = vsyncpa [#allocation5], 0
    %s19 = scalar_lea.sflag [#allocation5], 1
    %20 = vsyncpa %s19, 0
    loop: start=0, step=1, limit=4
    $region2: #{tpu_custom_call.1} parent=1 // loop_pre_header
      _
    $region3: #{tpu_custom_call.1} parent=1 // loop_header
      %s22 = sphi 0, %s26
      %p23 = scmp.ge.s32.totalorder %s22, 4
      %s32 = sphi 0, %s34
      %s35 = sphi 0, %s32
      %s36 = sphi 0, %s35
      %s52 = sphi 0, %s36
      %s56 = sphi 0, %s56
      %s58 = sphi 0, %s56
      %s59 = sphi 0, %s58
      %s73 = sphi 0, %s59
      %s77 = sphi 0, %s77
      %s79 = sphi 0, %s77
      %s80 = sphi 0, %s79
      %s94 = sphi 0, %s80
      %s98 = sphi 0, %s98
      %s100 = sphi 0, %s98
      %s101 = sphi 0, %s100
      %s115 = sphi 0, %s101
      %s119 = sphi 0, %s119
      %s121 = sphi 0, %s119
      %s122 = sphi 0, %s121
      %s136 = sphi 0, %s122
      %s140 = sphi 0, %s140
      %s142 = sphi 0, %s140
      %s143 = sphi 0, %s142
      %s157 = sphi 0, %s143
      %s161 = sphi 0, %s161
      %s163 = sphi 0, %s161
      %s164 = sphi 0, %s163
      %s178 = sphi 0, %s164
      %s182 = sphi 0, %s182
      %s184 = sphi 0, %s182
      %s185 = sphi 0, %s184
      %s199 = sphi 0, %s185
      %s203 = sphi 0, %s203
      %s205 = sphi 0, %s203
      %s206 = sphi 0, %s205
      %s220 = sphi 0, %s206
      %s224 = sphi 0, %s224
      %s226 = sphi 0, %s224
      %s227 = sphi 0, %s226
      %s241 = sphi 0, %s227
      %s245 = sphi 0, %s245
      %s247 = sphi 0, %s245
      %s248 = sphi 0, %s247
      %s262 = sphi 0, %s248
      %s266 = sphi 0, %s266
      %s268 = sphi 0, %s266
      %s269 = sphi 0, %s268
      %s283 = sphi 0, %s269
      %s287 = sphi 0, %s287
      %s289 = sphi 0, %s287
      %s290 = sphi 0, %s289
      %s304 = sphi 0, %s290
      %s310 = sphi 0, %s312
      %s313 = sphi 0, %s310
      %s314 = sphi 0, %s313
      %s330 = sphi 0, %s314
    $region4: #{tpu_custom_call.1} parent=1 // loop_header_branch
      %25 = sbr.rel (%p23) target = $region8
    $region5: #{tpu_custom_call.1} parent=1 // loop_body
      %s27 = ssub.s32 %s22, 1
      %s28 = ssub.s32 %s22, 2
      %s29 = sadd.s32 %s22, 1
      %s30 = ssub.s32 %s22, %s29
      %p31 = scmp.eq.s32.totalorder %s30, 0
      %s33 = sadd.s32 %s32, 1
      %s34 = scalar_select %p31, %s32, %s33
      %p37 = pneg %p31
      %p38 = scmp.eq.s32.totalorder %s22, 1
      %p39 = por %p37, %p38
      %p40 = scmp.ne.s32.totalorder %s32, %s35
      %p41 = scmp.eq.s32.totalorder %s22, 0
      %p42 = por %p40, %p41
      %p43 = scmp.ne.s32.totalorder %s32, %s35
      %p44 = scmp.eq.s32.totalorder %s27, 1
      %p45 = por %p43, %p44
      %p46 = scmp.ne.s32.totalorder %s35, %s36
      %p47 = scmp.eq.s32.totalorder %s27, 0
      %p48 = por %p46, %p47
      %p49 = scmp.ne.s32.totalorder %s35, %s36
      %p50 = scmp.eq.s32.totalorder %s28, 1
      %p51 = por %p49, %p50
      %p53 = scmp.ne.s32.totalorder %s36, %s52
      %p54 = scmp.eq.s32.totalorder %s28, 0
      %p55 = por %p53, %p54
      %s57 = sadd.s32 %s56, 1
      %p60 = scmp.eq.s32.totalorder %s22, 1
      %p61 = scmp.ne.s32.totalorder %s56, %s58
      %p62 = scmp.eq.s32.totalorder %s22, 0
      %p63 = por %p61, %p62
      %p64 = scmp.ne.s32.totalorder %s56, %s58
      %p65 = scmp.eq.s32.totalorder %s27, 1
      %p66 = por %p64, %p65
      %p67 = scmp.ne.s32.totalorder %s58, %s59
      %p68 = scmp.eq.s32.totalorder %s27, 0
      %p69 = por %p67, %p68
      %p70 = scmp.ne.s32.totalorder %s58, %s59
      %p71 = scmp.eq.s32.totalorder %s28, 1
      %p72 = por %p70, %p71
      %p74 = scmp.ne.s32.totalorder %s59, %s73
      %p75 = scmp.eq.s32.totalorder %s28, 0
      %p76 = por %p74, %p75
      %s78 = sadd.s32 %s77, 1
      %p81 = scmp.eq.s32.totalorder %s22, 1
      %p82 = scmp.ne.s32.totalorder %s77, %s79
      %p83 = scmp.eq.s32.totalorder %s22, 0
      %p84 = por %p82, %p83
      %p85 = scmp.ne.s32.totalorder %s77, %s79
      %p86 = scmp.eq.s32.totalorder %s27, 1
      %p87 = por %p85, %p86
      %p88 = scmp.ne.s32.totalorder %s79, %s80
      %p89 = scmp.eq.s32.totalorder %s27, 0
      %p90 = por %p88, %p89
      %p91 = scmp.ne.s32.totalorder %s79, %s80
      %p92 = scmp.eq.s32.totalorder %s28, 1
      %p93 = por %p91, %p92
      %p95 = scmp.ne.s32.totalorder %s80, %s94
      %p96 = scmp.eq.s32.totalorder %s28, 0
      %p97 = por %p95, %p96
      %s99 = sadd.s32 %s98, 1
      %p102 = scmp.eq.s32.totalorder %s22, 1
      %p103 = scmp.ne.s32.totalorder %s98, %s100
      %p104 = scmp.eq.s32.totalorder %s22, 0
      %p105 = por %p103, %p104
      %p106 = scmp.ne.s32.totalorder %s98, %s100
      %p107 = scmp.eq.s32.totalorder %s27, 1
      %p108 = por %p106, %p107
      %p109 = scmp.ne.s32.totalorder %s100, %s101
      %p110 = scmp.eq.s32.totalorder %s27, 0
      %p111 = por %p109, %p110
      %p112 = scmp.ne.s32.totalorder %s100, %s101
      %p113 = scmp.eq.s32.totalorder %s28, 1
      %p114 = por %p112, %p113
      %p116 = scmp.ne.s32.totalorder %s101, %s115
      %p117 = scmp.eq.s32.totalorder %s28, 0
      %p118 = por %p116, %p117
      %s120 = sadd.s32 %s119, 1
      %p123 = scmp.eq.s32.totalorder %s22, 1
      %p124 = scmp.ne.s32.totalorder %s119, %s121
      %p125 = scmp.eq.s32.totalorder %s22, 0
      %p126 = por %p124, %p125
      %p127 = scmp.ne.s32.totalorder %s119, %s121
      %p128 = scmp.eq.s32.totalorder %s27, 1
      %p129 = por %p127, %p128
      %p130 = scmp.ne.s32.totalorder %s121, %s122
      %p131 = scmp.eq.s32.totalorder %s27, 0
      %p132 = por %p130, %p131
      %p133 = scmp.ne.s32.totalorder %s121, %s122
      %p134 = scmp.eq.s32.totalorder %s28, 1
      %p135 = por %p133, %p134
      %p137 = scmp.ne.s32.totalorder %s122, %s136
      %p138 = scmp.eq.s32.totalorder %s28, 0
      %p139 = por %p137, %p138
      %s141 = sadd.s32 %s140, 1
      %p144 = scmp.eq.s32.totalorder %s22, 1
      %p145 = scmp.ne.s32.totalorder %s140, %s142
      %p146 = scmp.eq.s32.totalorder %s22, 0
      %p147 = por %p145, %p146
      %p148 = scmp.ne.s32.totalorder %s140, %s142
      %p149 = scmp.eq.s32.totalorder %s27, 1
      %p150 = por %p148, %p149
      %p151 = scmp.ne.s32.totalorder %s142, %s143
      %p152 = scmp.eq.s32.totalorder %s27, 0
      %p153 = por %p151, %p152
      %p154 = scmp.ne.s32.totalorder %s142, %s143
      %p155 = scmp.eq.s32.totalorder %s28, 1
      %p156 = por %p154, %p155
      %p158 = scmp.ne.s32.totalorder %s143, %s157
      %p159 = scmp.eq.s32.totalorder %s28, 0
      %p160 = por %p158, %p159
      %s162 = sadd.s32 %s161, 1
      %p165 = scmp.eq.s32.totalorder %s22, 1
      %p166 = scmp.ne.s32.totalorder %s161, %s163
      %p167 = scmp.eq.s32.totalorder %s22, 0
      %p168 = por %p166, %p167
      %p169 = scmp.ne.s32.totalorder %s161, %s163
      %p170 = scmp.eq.s32.totalorder %s27, 1
      %p171 = por %p169, %p170
      %p172 = scmp.ne.s32.totalorder %s163, %s164
      %p173 = scmp.eq.s32.totalorder %s27, 0
      %p174 = por %p172, %p173
      %p175 = scmp.ne.s32.totalorder %s163, %s164
      %p176 = scmp.eq.s32.totalorder %s28, 1
      %p177 = por %p175, %p176
      %p179 = scmp.ne.s32.totalorder %s164, %s178
      %p180 = scmp.eq.s32.totalorder %s28, 0
      %p181 = por %p179, %p180
      %s183 = sadd.s32 %s182, 1
      %p186 = scmp.eq.s32.totalorder %s22, 1
      %p187 = scmp.ne.s32.totalorder %s182, %s184
      %p188 = scmp.eq.s32.totalorder %s22, 0
      %p189 = por %p187, %p188
      %p190 = scmp.ne.s32.totalorder %s182, %s184
      %p191 = scmp.eq.s32.totalorder %s27, 1
      %p192 = por %p190, %p191
      %p193 = scmp.ne.s32.totalorder %s184, %s185
      %p194 = scmp.eq.s32.totalorder %s27, 0
      %p195 = por %p193, %p194
      %p196 = scmp.ne.s32.totalorder %s184, %s185
      %p197 = scmp.eq.s32.totalorder %s28, 1
      %p198 = por %p196, %p197
      %p200 = scmp.ne.s32.totalorder %s185, %s199
      %p201 = scmp.eq.s32.totalorder %s28, 0
      %p202 = por %p200, %p201
      %s204 = sadd.s32 %s203, 1
      %p207 = scmp.eq.s32.totalorder %s22, 1
      %p208 = scmp.ne.s32.totalorder %s203, %s205
      %p209 = scmp.eq.s32.totalorder %s22, 0
      %p210 = por %p208, %p209
      %p211 = scmp.ne.s32.totalorder %s203, %s205
      %p212 = scmp.eq.s32.totalorder %s27, 1
      %p213 = por %p211, %p212
      %p214 = scmp.ne.s32.totalorder %s205, %s206
      %p215 = scmp.eq.s32.totalorder %s27, 0
      %p216 = por %p214, %p215
      %p217 = scmp.ne.s32.totalorder %s205, %s206
      %p218 = scmp.eq.s32.totalorder %s28, 1
      %p219 = por %p217, %p218
      %p221 = scmp.ne.s32.totalorder %s206, %s220
      %p222 = scmp.eq.s32.totalorder %s28, 0
      %p223 = por %p221, %p222
      %s225 = sadd.s32 %s224, 1
      %p228 = scmp.eq.s32.totalorder %s22, 1
      %p229 = scmp.ne.s32.totalorder %s224, %s226
      %p230 = scmp.eq.s32.totalorder %s22, 0
      %p231 = por %p229, %p230
      %p232 = scmp.ne.s32.totalorder %s224, %s226
      %p233 = scmp.eq.s32.totalorder %s27, 1
      %p234 = por %p232, %p233
      %p235 = scmp.ne.s32.totalorder %s226, %s227
      %p236 = scmp.eq.s32.totalorder %s27, 0
      %p237 = por %p235, %p236
      %p238 = scmp.ne.s32.totalorder %s226, %s227
      %p239 = scmp.eq.s32.totalorder %s28, 1
      %p240 = por %p238, %p239
      %p242 = scmp.ne.s32.totalorder %s227, %s241
      %p243 = scmp.eq.s32.totalorder %s28, 0
      %p244 = por %p242, %p243
      %s246 = sadd.s32 %s245, 1
      %p249 = scmp.eq.s32.totalorder %s22, 1
      %p250 = scmp.ne.s32.totalorder %s245, %s247
      %p251 = scmp.eq.s32.totalorder %s22, 0
      %p252 = por %p250, %p251
      %p253 = scmp.ne.s32.totalorder %s245, %s247
      %p254 = scmp.eq.s32.totalorder %s27, 1
      %p255 = por %p253, %p254
      %p256 = scmp.ne.s32.totalorder %s247, %s248
      %p257 = scmp.eq.s32.totalorder %s27, 0
      %p258 = por %p256, %p257
      %p259 = scmp.ne.s32.totalorder %s247, %s248
      %p260 = scmp.eq.s32.totalorder %s28, 1
      %p261 = por %p259, %p260
      %p263 = scmp.ne.s32.totalorder %s248, %s262
      %p264 = scmp.eq.s32.totalorder %s28, 0
      %p265 = por %p263, %p264
      %s267 = sadd.s32 %s266, 1
      %p270 = scmp.eq.s32.totalorder %s22, 1
      %p271 = scmp.ne.s32.totalorder %s266, %s268
      %p272 = scmp.eq.s32.totalorder %s22, 0
      %p273 = por %p271, %p272
      %p274 = scmp.ne.s32.totalorder %s266, %s268
      %p275 = scmp.eq.s32.totalorder %s27, 1
      %p276 = por %p274, %p275
      %p277 = scmp.ne.s32.totalorder %s268, %s269
      %p278 = scmp.eq.s32.totalorder %s27, 0
      %p279 = por %p277, %p278
      %p280 = scmp.ne.s32.totalorder %s268, %s269
      %p281 = scmp.eq.s32.totalorder %s28, 1
      %p282 = por %p280, %p281
      %p284 = scmp.ne.s32.totalorder %s269, %s283
      %p285 = scmp.eq.s32.totalorder %s28, 0
      %p286 = por %p284, %p285
      %s288 = sadd.s32 %s287, 1
      %p291 = scmp.eq.s32.totalorder %s22, 1
      %p292 = scmp.ne.s32.totalorder %s287, %s289
      %p293 = scmp.eq.s32.totalorder %s22, 0
      %p294 = por %p292, %p293
      %p295 = scmp.ne.s32.totalorder %s287, %s289
      %p296 = scmp.eq.s32.totalorder %s27, 1
      %p297 = por %p295, %p296
      %p298 = scmp.ne.s32.totalorder %s289, %s290
      %p299 = scmp.eq.s32.totalorder %s27, 0
      %p300 = por %p298, %p299
      %p301 = scmp.ne.s32.totalorder %s289, %s290
      %p302 = scmp.eq.s32.totalorder %s28, 1
      %p303 = por %p301, %p302
      %p305 = scmp.ne.s32.totalorder %s290, %s304
      %p306 = scmp.eq.s32.totalorder %s28, 0
      %p307 = por %p305, %p306
      %s308 = ssub.s32 %s22, %s29
      %p309 = scmp.eq.s32.totalorder %s308, 0
      %s311 = sadd.s32 %s310, 1
      %s312 = scalar_select %p309, %s310, %s311
      %p315 = pneg %p309
      %p316 = scmp.eq.s32.totalorder %s22, 1
      %p317 = por %p315, %p316
      %p318 = scmp.ne.s32.totalorder %s310, %s313
      %p319 = scmp.eq.s32.totalorder %s22, 0
      %p320 = por %p318, %p319
      %p321 = scmp.ne.s32.totalorder %s310, %s313
      %p322 = scmp.eq.s32.totalorder %s27, 1
      %p323 = por %p321, %p322
      %p324 = scmp.ne.s32.totalorder %s313, %s314
      %p325 = scmp.eq.s32.totalorder %s27, 0
      %p326 = por %p324, %p325
      %p327 = scmp.ne.s32.totalorder %s313, %s314
      %p328 = scmp.eq.s32.totalorder %s28, 1
      %p329 = por %p327, %p328
      %p331 = scmp.ne.s32.totalorder %s314, %s330
      %p332 = scmp.eq.s32.totalorder %s28, 0
      %p333 = por %p331, %p332
      %p334 = scmp.le.s32.totalorder 1, %s22
      %p335 = scmp.lt.s32.totalorder %s22, 3
      %p336 = pnand %p334, %p335
      %p337 = pneg %p336
      // Predicated region
      $region9: #{tpu_custom_call.1} parent=5 // pred_check
        _
      $region10: #{tpu_custom_call.1} parent=5 // pred_check_branch
        %339 = sbr.rel (%p336) target = $region12
      $region11: #{tpu_custom_call.1} parent=5 // pred_region
        %s340 = ssub.s32 %s22, 1
        // Predicated region
        $region13: #{tpu_custom_call.1} parent=11 // pred_check
          %p341 = pneg %p69
        $region14: #{tpu_custom_call.1} parent=11 // pred_check_branch
          %343 = sbr.rel (%p341) target = $region16
        $region15: #{tpu_custom_call.1} parent=11 // pred_region
          _
        $region16: #{tpu_custom_call.1} parent=11 // pred_fallthru
          _
        // Predicated region
        $region17: #{tpu_custom_call.1} parent=11 // pred_check
          %p344 = pneg %p90
        $region18: #{tpu_custom_call.1} parent=11 // pred_check_branch
          %346 = sbr.rel (%p344) target = $region20
        $region19: #{tpu_custom_call.1} parent=11 // pred_region
          _
        $region20: #{tpu_custom_call.1} parent=11 // pred_fallthru
          _
        // Predicated region
        $region21: #{tpu_custom_call.1} parent=11 // pred_check
          %p347 = pneg %p111
        $region22: #{tpu_custom_call.1} parent=11 // pred_check_branch
          %349 = sbr.rel (%p347) target = $region24
        $region23: #{tpu_custom_call.1} parent=11 // pred_region
          _
        $region24: #{tpu_custom_call.1} parent=11 // pred_fallthru
          _
        // Predicated region
        $region25: #{tpu_custom_call.1} parent=11 // pred_check
          %p350 = pneg %p132
        $region26: #{tpu_custom_call.1} parent=11 // pred_check_branch
          %352 = sbr.rel (%p350) target = $region28
        $region27: #{tpu_custom_call.1} parent=11 // pred_region
          _
        $region28: #{tpu_custom_call.1} parent=11 // pred_fallthru
          _
        // Predicated region
        $region29: #{tpu_custom_call.1} parent=11 // pred_check
          %p353 = pneg %p153
        $region30: #{tpu_custom_call.1} parent=11 // pred_check_branch
          %355 = sbr.rel (%p353) target = $region32
        $region31: #{tpu_custom_call.1} parent=11 // pred_region
          _
        $region32: #{tpu_custom_call.1} parent=11 // pred_fallthru
          _
        // Predicated region
        $region33: #{tpu_custom_call.1} parent=11 // pred_check
          %p356 = pneg %p174
        $region34: #{tpu_custom_call.1} parent=11 // pred_check_branch
          %358 = sbr.rel (%p356) target = $region36
        $region35: #{tpu_custom_call.1} parent=11 // pred_region
          _
        $region36: #{tpu_custom_call.1} parent=11 // pred_fallthru
          _
        // Predicated region
        $region37: #{tpu_custom_call.1} parent=11 // pred_check
          %p359 = pneg %p195
        $region38: #{tpu_custom_call.1} parent=11 // pred_check_branch
          %361 = sbr.rel (%p359) target = $region40
        $region39: #{tpu_custom_call.1} parent=11 // pred_region
          _
        $region40: #{tpu_custom_call.1} parent=11 // pred_fallthru
          _
        // Predicated region
        $region41: #{tpu_custom_call.1} parent=11 // pred_check
          %p362 = pneg %p216
        $region42: #{tpu_custom_call.1} parent=11 // pred_check_branch
          %364 = sbr.rel (%p362) target = $region44
        $region43: #{tpu_custom_call.1} parent=11 // pred_region
          _
        $region44: #{tpu_custom_call.1} parent=11 // pred_fallthru
          _
        // Predicated region
        $region45: #{tpu_custom_call.1} parent=11 // pred_check
          %p365 = pneg %p237
        $region46: #{tpu_custom_call.1} parent=11 // pred_check_branch
          %367 = sbr.rel (%p365) target = $region48
        $region47: #{tpu_custom_call.1} parent=11 // pred_region
          _
        $region48: #{tpu_custom_call.1} parent=11 // pred_fallthru
          _
        // Predicated region
        $region49: #{tpu_custom_call.1} parent=11 // pred_check
          %p368 = pneg %p258
        $region50: #{tpu_custom_call.1} parent=11 // pred_check_branch
          %370 = sbr.rel (%p368) target = $region52
        $region51: #{tpu_custom_call.1} parent=11 // pred_region
          _
        $region52: #{tpu_custom_call.1} parent=11 // pred_fallthru
          _
        // Predicated region
        $region53: #{tpu_custom_call.1} parent=11 // pred_check
          %p371 = pneg %p279
        $region54: #{tpu_custom_call.1} parent=11 // pred_check_branch
          %373 = sbr.rel (%p371) target = $region56
        $region55: #{tpu_custom_call.1} parent=11 // pred_region
          _
        $region56: #{tpu_custom_call.1} parent=11 // pred_fallthru
          _
        // Predicated region
        $region57: #{tpu_custom_call.1} parent=11 // pred_check
          %p374 = pneg %p300
        $region58: #{tpu_custom_call.1} parent=11 // pred_check_branch
          %376 = sbr.rel (%p374) target = $region60
        $region59: #{tpu_custom_call.1} parent=11 // pred_region
          _
        $region60: #{tpu_custom_call.1} parent=11 // pred_fallthru
          _
      $region12: #{tpu_custom_call.1} parent=5 // pred_fallthru
        _
      %p377 = scmp.lt.s32.totalorder %s22, 2
      // Predicated region
      $region61: #{tpu_custom_call.1} parent=5 // pred_check
        %p378 = pneg %p377
      $region62: #{tpu_custom_call.1} parent=5 // pred_check_branch
        %380 = sbr.rel (%p378) target = $region64
      $region63: #{tpu_custom_call.1} parent=5 // pred_region
        // Predicated region
        $region65: #{tpu_custom_call.1} parent=63 // pred_check
          %p381 = pneg %p42
        $region66: #{tpu_custom_call.1} parent=63 // pred_check_branch
          %383 = sbr.rel (%p381) target = $region68
        $region67: #{tpu_custom_call.1} parent=63 // pred_region
          %p384 = scmp.lt.s32.totalorder %s22, 1
          %s385 = scalar_select %p384, %s22, 1
          %s386 = smul.addr %s385, 10
          %s387 = smul.addr %s386, 8
          %s388 = scalar_lea.vmem %s0, %s387
        $region68: #{tpu_custom_call.1} parent=63 // pred_fallthru
          _
      $region64: #{tpu_custom_call.1} parent=5 // pred_fallthru
        _
      %p389 = scmp.le.s32.totalorder 1, %s22
      %p390 = scmp.lt.s32.totalorder %s22, 3
      %p391 = pnand %p389, %p390
      %p392 = pneg %p391
      // Predicated region
      $region69: #{tpu_custom_call.1} parent=5 // pred_check
        _
      $region70: #{tpu_custom_call.1} parent=5 // pred_check_branch
        %394 = sbr.rel (%p391) target = $region72
      $region71: #{tpu_custom_call.1} parent=5 // pred_region
        %s395 = ssub.s32 %s22, 1
        %p396 = scmp.lt.s32.totalorder %s27, 1
        %s397 = scalar_select %p396, %s27, 1
        %s398 = smul.addr %s397, 10
        %s399 = smul.addr %s398, 8
        %s400 = scalar_lea.vmem %s0, %s399
        %p401 = pneg %p48
        %p402 = pneg %p45
        %p403 = pneg %p69
        %p404 = pneg %p66
        %p405 = pneg %p90
        %p406 = pneg %p87
        %p407 = pneg %p111
        %p408 = pneg %p108
        %p409 = pneg %p132
        %p410 = pneg %p129
        %p411 = pneg %p153
        %p412 = pneg %p150
        %p413 = pneg %p174
        %p414 = pneg %p171
        %p415 = pneg %p195
        %p416 = pneg %p192
        %p417 = pneg %p216
        %p418 = pneg %p213
        %p419 = pneg %p237
        %p420 = pneg %p234
        %p421 = pneg %p258
        %p422 = pneg %p255
        %p423 = pneg %p279
        %p424 = pneg %p276
        %p425 = pneg %p300
        %p426 = pneg %p297
        %p427 = pneg %p326
        %p428 = pneg %p323
        %s429 = sand.u32 %s313, 1
        %s430 = scalar_lea.sflag [#allocation5], %s429
        %s431 = sand.u32 %s313, 1
        %s432 = smul.addr %s431, 16
        %s433 = scalar_lea.vmem [#allocation4], %s432
        %p434 = scmp.lt.s32.totalorder %s27, 1
        %s435 = scalar_select %p434, %s27, 1
        %s436 = smul.addr %s435, 10
        %s437 = smul.addr %s436, 8
        %s438 = scalar_lea.vmem %s0, %s437
        %v439 = vld [vmem:[%s1] sm:$0x3]
        %v440 = vld [vmem:[%s2] sm:$0xff]
        %v441 = vld [vmem:[%s438] sm:$0xff]
        %v442 = vld [vmem:[%s438 + $0x8] sm:$0xff]
        %v443 = vld [vmem:[%s438 + $0x10] sm:$0xff]
        %v444 = vld [vmem:[%s438 + $0x18] sm:$0xff]
        %v445 = vld [vmem:[%s438 + $0x20] sm:$0xff]
        %v446 = vld [vmem:[%s438 + $0x28] sm:$0xff]
        %v447 = vld [vmem:[%s438 + $0x30] sm:$0xff]
        %v448 = vld [vmem:[%s438 + $0x38] sm:$0xff]
        %v449 = vld [vmem:[%s438 + $0x40] sm:$0xf]
        %v450 = vld [vmem:[%s438 + $0x48] sm:$0xf]
        %vm451 = vcmask 293888
        %v453 = vsel %vm451, %v440, 0
        %vm455 = vcmask 1043456
        %v457 = vsel %vm455, %v449, 0
        %v460 = vsel %vm455, %v450, 0
        %462 = vmatprep.subr.mxu0 %v442
        %463 = vmatpush1.msra.mxu0 %v441
        %464 = vmatprep.subr.mxu0 %v444
        %465 = vmatpush1.msra.mxu0 %v443
        %466 = vmatprep.subr.mxu0 %v446
        %467 = vmatpush1.msra.mxu0 %v445
        %468 = vmatprep.subr.mxu0 %v448
        %469 = vmatpush1.msra.mxu0 %v447
        %470 = vmatprep.subr.mxu0 %v460
        %471 = vmatpush1.msra.mxu0 %v457
        %472 = vmatprep.subr.mxu0 0.0
        %473 = vmatpush1.msra.mxu0 0.0
        %474 = vmatprep.subr.mxu0 0.0
        %475 = vmatpush1.msra.mxu0 0.0
        %476 = vmatprep.subr.mxu0 0.0
        %477 = vmatpush1.msra.mxu0 0.0
        %478 = vmatprep.subr.mxu0 0.0
        %479 = vmatpush1.msra.mxu0 0.0
        %480 = vmatprep.subr.mxu0 0.0
        %481 = vmatpush1.msra.mxu0 0.0
        %482 = vmatprep.subr.mxu0 0.0
        %483 = vmatpush1.msra.mxu0 0.0
        %484 = vmatprep.subr.mxu0 0.0
        %485 = vmatpush1.msra.mxu0 0.0
        %486 = vmatprep.subr.mxu0 0.0
        %487 = vmatpush1.msra.mxu0 0.0
        %488 = vmatprep.subr.mxu0 0.0
        %489 = vmatpush1.msra.mxu0 0.0
        %490 = vmatprep.subr.mxu0 0.0
        %491 = vmatpush1.msra.mxu0 0.0
        %492 = vmatprep.subr.mxu0 0.0
        %493 = vmatpush1.msra.mxu0 0.0
        %494 = vmatprep.subr.mxu0 0.0
        %495 = vmatpush1.msra.mxu0 0.0
        %496 = vmatprep.subr.mxu0 0.0
        %497 = vmatpush1.msra.mxu0 0.0
        %498 = vmatprep.subr.mxu0 0.0
        %499 = vmatpush1.msra.mxu0 0.0
        %500 = vmatprep.subr.mxu0 0.0
        %501 = vmatpush1.msra.mxu0 0.0
        %502 = vmatprep.subr.mxu0 0.0
        %503 = vmatpush1.msra.mxu0 0.0
        %504 = vmatprep.subr.mxu0 0.0
        %505 = vmatpush1.msra.mxu0 0.0
        %506 = vmatprep.subr.mxu0 0.0
        %507 = vmatpush1.msra.mxu0 0.0
        %508 = vmatprep.subr.mxu0 0.0
        %509 = vmatpush1.msra.mxu0 0.0
        %510 = vmatprep.subr.mxu0 0.0
        %511 = vmatpush1.msra.mxu0 0.0
        %512 = vmatprep.subr.mxu0 0.0
        %513 = vmatpush1.msra.mxu0 0.0
        %514 = vmatprep.subr.mxu0 0.0
        %515 = vmatpush1.msra.mxu0 0.0
        %516 = vmatprep.subr.mxu0 0.0
        %517 = vmatpush1.msra.mxu0 0.0
        %518 = vmatprep.subr.mxu0 0.0
        %519 = vmatpush1.msra.mxu0 0.0
        %520 = vmatprep.subr.mxu0 0.0
        %521 = vmatpush1.msra.mxu0 0.0
        %522 = vmatprep.subr.mxu0 0.0
        %523 = vmatpush1.msra.mxu0 0.0
        %524 = vmatprep.subr.mxu0 0.0
        %525 = vmatpush1.msra.mxu0 0.0
        %526 = vmatprep.mubr.f32.mxu0 0.0
        %527 = vmatmul.mubr.f32.gmra.mrb[0].mxu0 %v453
        %v528 = vpop.f32.mrb[0].mxu0
        %v529 = vadd.f32 0.0, %v528
        %v530 = vpop.f32.mrb[0].mxu0
        %v531 = vadd.f32 0.0, %v530
        %532 = vdwg.mxu0
        %v533 = vld [vmem:[%s3] sm:$0xff]
        %535 = vset.pattern.permute.xlu0 0
        %536 = vperm.xlu0 %535, %v533
        %v537 = vpop.permute.xlu0 %536
        %v539 = vmul.f32 %v529, %v537
        %v540 = vmul.f32 %v531, %v537
        %v541 = vld [vmem:[%s4] sm:$0xff]
        %543 = vset.pattern.permute.xlu0 0
        %544 = vperm.xlu0 %543, %v541
        %v545 = vpop.permute.xlu0 %544
        %v547 = vadd.f32 %v539, %v545
        %v548 = vadd.f32 %v540, %v545
        %v549 = vmax.f32 %v547, 0.0
        %v550 = vmax.f32 %v548, 0.0
        %v552 = vlaneseq
        %v553 = vshrl.u32 %v552, 7
        %v554 = vsub.s32 0, %v553
        %v555 = vrot.slane %v439, %v554
        %v556 = vlaneseq
        %v557 = vshrl.u32 %v556, 7
        %v558 = vsub.s32 1, %v557
        %v559 = vrot.slane %v439, %v558
        %v562 = vmul.f32 %v549, %v555
        %v563 = vmul.f32 %v550, %v559
        %564 = vst [vmem:[#allocation2] sm:$0xff] 0.0
        %565 = vst [vmem:[#allocation2 + $0x18] sm:$0xff] 0.0
        %566 = vst [vmem:[#allocation2 + $0x8] sm:$0xff] %v562
        %567 = vst [vmem:[#allocation2 + $0x10] sm:$0xff] %v563
        %v568 = vld [vmem:[#allocation2] sm:$0xff]
        %v569 = vld [vmem:[#allocation2 + $0x8] sm:$0xff]
        %v570 = vld [vmem:[#allocation2 + $0x10] sm:$0xff]
        %574 = vrot.lane.b32.xlu0 %v568, 11
        %v575 = vpop.permute.xlu0 %574
        %576 = vrot.lane.b32.xlu0 %v569, 11
        %v577 = vpop.permute.xlu0 %576
        %578 = vrot.lane.b32.xlu0 %v570, 11
        %v579 = vpop.permute.xlu0 %578
        %vm580 = vcmask 89088
        %v581 = vsel %vm580, %v575, %v577
        %v582 = vsel %vm580, %v577, %v579
        %585 = vst [vmem:[#allocation3] sm:$0xff] %v581
        %586 = vst [vmem:[#allocation3 + $0x8] sm:$0xff] %v582
        %v587 = vld [vmem:[#allocation2] sm:$0xff]
        %v588 = vld [vmem:[#allocation2 + $0x8] sm:$0xff]
        %v589 = vld [vmem:[#allocation2 + $0x10] sm:$0xff]
        %593 = vrot.lane.b32.xlu0 %v587, 10
        %v594 = vpop.permute.xlu0 %593
        %595 = vrot.lane.b32.xlu0 %v588, 10
        %v596 = vpop.permute.xlu0 %595
        %597 = vrot.lane.b32.xlu0 %v589, 10
        %v598 = vpop.permute.xlu0 %597
        %vm599 = vcmask 80896
        %v600 = vsel %vm599, %v594, %v596
        %v601 = vsel %vm599, %v596, %v598
        %604 = vst [vmem:[#allocation3 + $0x10] sm:$0xff] %v600
        %605 = vst [vmem:[#allocation3 + $0x18] sm:$0xff] %v601
        %v606 = vld [vmem:[#allocation2] sm:$0xff]
        %v607 = vld [vmem:[#allocation2 + $0x8] sm:$0xff]
        %v608 = vld [vmem:[#allocation2 + $0x10] sm:$0xff]
        %612 = vrot.lane.b32.xlu0 %v606, 9
        %v613 = vpop.permute.xlu0 %612
        %614 = vrot.lane.b32.xlu0 %v607, 9
        %v615 = vpop.permute.xlu0 %614
        %616 = vrot.lane.b32.xlu0 %v608, 9
        %v617 = vpop.permute.xlu0 %616
        %vm618 = vcmask 72704
        %v619 = vsel %vm618, %v613, %v615
        %v620 = vsel %vm618, %v615, %v617
        %623 = vst [vmem:[#allocation3 + $0x20] sm:$0xff] %v619
        %624 = vst [vmem:[#allocation3 + $0x28] sm:$0xff] %v620
        %v625 = vld [vmem:[#allocation2] sm:$0xff]
        %v626 = vld [vmem:[#allocation2 + $0x8] sm:$0xff]
        %v627 = vld [vmem:[#allocation2 + $0x10] sm:$0xff]
        %631 = vrot.lane.b32.xlu0 %v625, 1
        %v632 = vpop.permute.xlu0 %631
        %633 = vrot.lane.b32.xlu0 %v626, 1
        %v634 = vpop.permute.xlu0 %633
        %635 = vrot.lane.b32.xlu0 %v627, 1
        %v636 = vpop.permute.xlu0 %635
        %vm637 = vcmask 7168
        %v638 = vsel %vm637, %v632, %v634
        %v639 = vsel %vm637, %v634, %v636
        %642 = vst [vmem:[#allocation3 + $0x30] sm:$0xff] %v638
        %643 = vst [vmem:[#allocation3 + $0x38] sm:$0xff] %v639
        %v644 = vld [vmem:[#allocation2 + $0x8] sm:$0xff]
        %v645 = vld [vmem:[#allocation2 + $0x10] sm:$0xff]
        %646 = vst [vmem:[#allocation3 + $0x40] sm:$0xff] %v644
        %647 = vst [vmem:[#allocation3 + $0x48] sm:$0xff] %v645
        %v648 = vld [vmem:[#allocation2 + $0x8] sm:$0xff]
        %v649 = vld [vmem:[#allocation2 + $0x10] sm:$0xff]
        %v650 = vld [vmem:[#allocation2 + $0x18] sm:$0xff]
        %654 = vrot.lane.b32.xlu0 %v648, 127
        %v655 = vpop.permute.xlu0 %654
        %656 = vrot.lane.b32.xlu0 %v649, 127
        %v657 = vpop.permute.xlu0 %656
        %658 = vrot.lane.b32.xlu0 %v650, 127
        %v659 = vpop.permute.xlu0 %658
        %vm660 = vcmask 1039360
        %v661 = vsel %vm660, %v655, %v657
        %v662 = vsel %vm660, %v657, %v659
        %665 = vst [vmem:[#allocation3 + $0x50] sm:$0xff] %v661
        %666 = vst [vmem:[#allocation3 + $0x58] sm:$0xff] %v662
        %v667 = vld [vmem:[#allocation2 + $0x8] sm:$0xff]
        %v668 = vld [vmem:[#allocation2 + $0x10] sm:$0xff]
        %v669 = vld [vmem:[#allocation2 + $0x18] sm:$0xff]
        %673 = vrot.lane.b32.xlu0 %v667, 119
        %v674 = vpop.permute.xlu0 %673
        %675 = vrot.lane.b32.xlu0 %v668, 119
        %v676 = vpop.permute.xlu0 %675
        %677 = vrot.lane.b32.xlu0 %v669, 119
        %v678 = vpop.permute.xlu0 %677
        %vm679 = vcmask 973824
        %v680 = vsel %vm679, %v674, %v676
        %v681 = vsel %vm679, %v676, %v678
        %684 = vst [vmem:[#allocation3 + $0x60] sm:$0xff] %v680
        %685 = vst [vmem:[#allocation3 + $0x68] sm:$0xff] %v681
        %v686 = vld [vmem:[#allocation2 + $0x8] sm:$0xff]
        %v687 = vld [vmem:[#allocation2 + $0x10] sm:$0xff]
        %v688 = vld [vmem:[#allocation2 + $0x18] sm:$0xff]
        %692 = vrot.lane.b32.xlu0 %v686, 118
        %v693 = vpop.permute.xlu0 %692
        %694 = vrot.lane.b32.xlu0 %v687, 118
        %v695 = vpop.permute.xlu0 %694
        %696 = vrot.lane.b32.xlu0 %v688, 118
        %v697 = vpop.permute.xlu0 %696
        %vm698 = vcmask 965632
        %v699 = vsel %vm698, %v693, %v695
        %v700 = vsel %vm698, %v695, %v697
        %703 = vst [vmem:[#allocation3 + $0x70] sm:$0xff] %v699
        %704 = vst [vmem:[#allocation3 + $0x78] sm:$0xff] %v700
        %v705 = vld [vmem:[#allocation2 + $0x8] sm:$0xff]
        %v706 = vld [vmem:[#allocation2 + $0x10] sm:$0xff]
        %v707 = vld [vmem:[#allocation2 + $0x18] sm:$0xff]
        %711 = vrot.lane.b32.xlu0 %v705, 117
        %v712 = vpop.permute.xlu0 %711
        %713 = vrot.lane.b32.xlu0 %v706, 117
        %v714 = vpop.permute.xlu0 %713
        %715 = vrot.lane.b32.xlu0 %v707, 117
        %v716 = vpop.permute.xlu0 %715
        %vm717 = vcmask 957440
        %v718 = vsel %vm717, %v712, %v714
        %v719 = vsel %vm717, %v714, %v716
        %722 = vst [vmem:[#allocation3 + $0x80] sm:$0xff] %v718
        %723 = vst [vmem:[#allocation3 + $0x88] sm:$0xff] %v719
        %v724 = vld [vmem:[%s5] sm:$0xff]
        %v725 = vld [vmem:[#allocation3] sm:$0xff]
        %v726 = vld [vmem:[#allocation3 + $0x8] sm:$0xff]
        %v727 = vld [vmem:[#allocation3 + $0x10] sm:$0xff]
        %v728 = vld [vmem:[#allocation3 + $0x18] sm:$0xff]
        %v729 = vld [vmem:[#allocation3 + $0x20] sm:$0xff]
        %v730 = vld [vmem:[#allocation3 + $0x28] sm:$0xff]
        %v731 = vld [vmem:[#allocation3 + $0x30] sm:$0xff]
        %v732 = vld [vmem:[#allocation3 + $0x38] sm:$0xff]
        %v733 = vld [vmem:[#allocation3 + $0x40] sm:$0xff]
        %v734 = vld [vmem:[#allocation3 + $0x48] sm:$0xff]
        %v735 = vld [vmem:[#allocation3 + $0x50] sm:$0xff]
        %v736 = vld [vmem:[#allocation3 + $0x58] sm:$0xff]
        %v737 = vld [vmem:[#allocation3 + $0x60] sm:$0xff]
        %v738 = vld [vmem:[#allocation3 + $0x68] sm:$0xff]
        %v739 = vld [vmem:[#allocation3 + $0x70] sm:$0xff]
        %v740 = vld [vmem:[#allocation3 + $0x78] sm:$0xff]
        %v741 = vld [vmem:[#allocation3 + $0x80] sm:$0xff]
        %v742 = vld [vmem:[#allocation3 + $0x88] sm:$0xff]
        %vm743 = vcmask 588800
        %v745 = vsel %vm743, %v724, 0
        %747 = vmatprep.subr.mxu0 %v726
        %748 = vmatpush1.msra.mxu0 %v725
        %749 = vmatprep.subr.mxu0 %v728
        %750 = vmatpush1.msra.mxu0 %v727
        %751 = vmatprep.subr.mxu0 %v730
        %752 = vmatpush1.msra.mxu0 %v729
        %753 = vmatprep.subr.mxu0 %v732
        %754 = vmatpush1.msra.mxu0 %v731
        %755 = vmatprep.subr.mxu0 %v734
        %756 = vmatpush1.msra.mxu0 %v733
        %757 = vmatprep.subr.mxu0 %v736
        %758 = vmatpush1.msra.mxu0 %v735
        %759 = vmatprep.subr.mxu0 %v738
        %760 = vmatpush1.msra.mxu0 %v737
        %761 = vmatprep.subr.mxu0 %v740
        %762 = vmatpush1.msra.mxu0 %v739
        %763 = vmatprep.subr.mxu0 %v742
        %764 = vmatpush1.msra.mxu0 %v741
        %765 = vmatprep.subr.mxu0 0.0
        %766 = vmatpush1.msra.mxu0 0.0
        %767 = vmatprep.subr.mxu0 0.0
        %768 = vmatpush1.msra.mxu0 0.0
        %769 = vmatprep.subr.mxu0 0.0
        %770 = vmatpush1.msra.mxu0 0.0
        %771 = vmatprep.subr.mxu0 0.0
        %772 = vmatpush1.msra.mxu0 0.0
        %773 = vmatprep.subr.mxu0 0.0
        %774 = vmatpush1.msra.mxu0 0.0
        %775 = vmatprep.subr.mxu0 0.0
        %776 = vmatpush1.msra.mxu0 0.0
        %777 = vmatprep.subr.mxu0 0.0
        %778 = vmatpush1.msra.mxu0 0.0
        %779 = vmatprep.subr.mxu0 0.0
        %780 = vmatpush1.msra.mxu0 0.0
        %781 = vmatprep.subr.mxu0 0.0
        %782 = vmatpush1.msra.mxu0 0.0
        %783 = vmatprep.subr.mxu0 0.0
        %784 = vmatpush1.msra.mxu0 0.0
        %785 = vmatprep.subr.mxu0 0.0
        %786 = vmatpush1.msra.mxu0 0.0
        %787 = vmatprep.subr.mxu0 0.0
        %788 = vmatpush1.msra.mxu0 0.0
        %789 = vmatprep.subr.mxu0 0.0
        %790 = vmatpush1.msra.mxu0 0.0
        %791 = vmatprep.subr.mxu0 0.0
        %792 = vmatpush1.msra.mxu0 0.0
        %793 = vmatprep.subr.mxu0 0.0
        %794 = vmatpush1.msra.mxu0 0.0
        %795 = vmatprep.subr.mxu0 0.0
        %796 = vmatpush1.msra.mxu0 0.0
        %797 = vmatprep.subr.mxu0 0.0
        %798 = vmatpush1.msra.mxu0 0.0
        %799 = vmatprep.subr.mxu0 0.0
        %800 = vmatpush1.msra.mxu0 0.0
        %801 = vmatprep.subr.mxu0 0.0
        %802 = vmatpush1.msra.mxu0 0.0
        %803 = vmatprep.subr.mxu0 0.0
        %804 = vmatpush1.msra.mxu0 0.0
        %805 = vmatprep.subr.mxu0 0.0
        %806 = vmatpush1.msra.mxu0 0.0
        %807 = vmatprep.subr.mxu0 0.0
        %808 = vmatpush1.msra.mxu0 0.0
        %809 = vmatprep.subr.mxu0 0.0
        %810 = vmatpush1.msra.mxu0 0.0
        %811 = vmatprep.mubr.f32.mxu0 0.0
        %812 = vmatmul.mubr.f32.gmra.mrb[0].mxu0 %v745
        %v813 = vpop.f32.mrb[0].mxu0
        %v814 = vadd.f32 0.0, %v813
        %v815 = vpop.f32.mrb[0].mxu0
        %v816 = vadd.f32 0.0, %v815
        %817 = vdwg.mxu0
        %v818 = vld [vmem:[%s6] sm:$0xff]
        %820 = vset.pattern.permute.xlu0 0
        %821 = vperm.xlu0 %820, %v818
        %v822 = vpop.permute.xlu0 %821
        %v824 = vmul.f32 %v814, %v822
        %v825 = vmul.f32 %v816, %v822
        %v826 = vld [vmem:[%s7] sm:$0xff]
        %828 = vset.pattern.permute.xlu0 0
        %829 = vperm.xlu0 %828, %v826
        %v830 = vpop.permute.xlu0 %829
        %v832 = vadd.f32 %v824, %v830
        %v833 = vadd.f32 %v825, %v830
        %v834 = vmul.f32 %v832, %v555
        %v835 = vmul.f32 %v833, %v559
        %v836 = vlaneseq
        %v837 = vand.u32 %v836, 127
        %838 = vadd.xlane.f32.xlu0 %v834
        %v839 = vpop.xlane.xlu0 %838
        %v840 = vmul.f32 %v839, 0.015625
        %vm841 = vcmp.eq.s32.totalorder %v837, 0
        %v842 = vsel %vm841, %v840, 0.0
        %v843 = vadd.f32 %v842, 0.0
        %844 = vadd.xlane.f32.xlu0 %v835
        %v845 = vpop.xlane.xlu0 %844
        %v846 = vmul.f32 %v845, 0.015625
        %vm847 = vcmp.eq.s32.totalorder %v837, 1
        %v848 = vsel %vm847, %v846, 0.0
        %v849 = vadd.f32 %v843, %v848
        %v850 = vld [vmem:[%s8] sm:$0x3]
        %vm851 = vcmask 64512
        %v853 = vsel %vm851, %v850, 0
        %855 = vmatprep.subr.mxu0 0.0
        %856 = vmatpush1.msra.mxu0 %v849
        %857 = vmatprep.subr.mxu0 0.0
        %858 = vmatpush1.msra.mxu0 0.0
        %859 = vmatprep.subr.mxu0 0.0
        %860 = vmatpush1.msra.mxu0 0.0
        %861 = vmatprep.subr.mxu0 0.0
        %862 = vmatpush1.msra.mxu0 0.0
        %863 = vmatprep.subr.mxu0 0.0
        %864 = vmatpush1.msra.mxu0 0.0
        %865 = vmatprep.subr.mxu0 0.0
        %866 = vmatpush1.msra.mxu0 0.0
        %867 = vmatprep.subr.mxu0 0.0
        %868 = vmatpush1.msra.mxu0 0.0
        %869 = vmatprep.subr.mxu0 0.0
        %870 = vmatpush1.msra.mxu0 0.0
        %871 = vmatprep.subr.mxu0 0.0
        %872 = vmatpush1.msra.mxu0 0.0
        %873 = vmatprep.subr.mxu0 0.0
        %874 = vmatpush1.msra.mxu0 0.0
        %875 = vmatprep.subr.mxu0 0.0
        %876 = vmatpush1.msra.mxu0 0.0
        %877 = vmatprep.subr.mxu0 0.0
        %878 = vmatpush1.msra.mxu0 0.0
        %879 = vmatprep.subr.mxu0 0.0
        %880 = vmatpush1.msra.mxu0 0.0
        %881 = vmatprep.subr.mxu0 0.0
        %882 = vmatpush1.msra.mxu0 0.0
        %883 = vmatprep.subr.mxu0 0.0
        %884 = vmatpush1.msra.mxu0 0.0
        %885 = vmatprep.subr.mxu0 0.0
        %886 = vmatpush1.msra.mxu0 0.0
        %887 = vmatprep.subr.mxu0 0.0
        %888 = vmatpush1.msra.mxu0 0.0
        %889 = vmatprep.subr.mxu0 0.0
        %890 = vmatpush1.msra.mxu0 0.0
        %891 = vmatprep.subr.mxu0 0.0
        %892 = vmatpush1.msra.mxu0 0.0
        %893 = vmatprep.subr.mxu0 0.0
        %894 = vmatpush1.msra.mxu0 0.0
        %895 = vmatprep.subr.mxu0 0.0
        %896 = vmatpush1.msra.mxu0 0.0
        %897 = vmatprep.subr.mxu0 0.0
        %898 = vmatpush1.msra.mxu0 0.0
        %899 = vmatprep.subr.mxu0 0.0
        %900 = vmatpush1.msra.mxu0 0.0
        %901 = vmatprep.subr.mxu0 0.0
        %902 = vmatpush1.msra.mxu0 0.0
        %903 = vmatprep.subr.mxu0 0.0
        %904 = vmatpush1.msra.mxu0 0.0
        %905 = vmatprep.subr.mxu0 0.0
        %906 = vmatpush1.msra.mxu0 0.0
        %907 = vmatprep.subr.mxu0 0.0
        %908 = vmatpush1.msra.mxu0 0.0
        %909 = vmatprep.subr.mxu0 0.0
        %910 = vmatpush1.msra.mxu0 0.0
        %911 = vmatprep.subr.mxu0 0.0
        %912 = vmatpush1.msra.mxu0 0.0
        %913 = vmatprep.subr.mxu0 0.0
        %914 = vmatpush1.msra.mxu0 0.0
        %915 = vmatprep.subr.mxu0 0.0
        %916 = vmatpush1.msra.mxu0 0.0
        %917 = vmatprep.subr.mxu0 0.0
        %918 = vmatpush1.msra.mxu0 0.0
        %919 = vmatprep.mubr.f32.mxu0 0.0
        %920 = vmatmul.mubr.f32.gmra.mrb[0].mxu0 %v853
        %v921 = vpop.f32.mrb[0].mxu0
        %v922 = vadd.f32 0.0, %v921
        %v923 = vpop.f32.mrb[0].mxu0
        %924 = vdwg.mxu0
        %v925 = vmax.f32 %v922, 0.0
        %v926 = vld [vmem:[%s9] sm:$0xff]
        %vm927 = vcmask 15360
        %v929 = vsel %vm927, %v926, 0
        %vm931 = vcmask 1041408
        %v933 = vsel %vm931, %v925, 0
        %935 = vmatprep.subr.mxu0 0.0
        %936 = vmatpush1.msra.mxu0 %v933
        %937 = vmatprep.subr.mxu0 0.0
        %938 = vmatpush1.msra.mxu0 0.0
        %939 = vmatprep.subr.mxu0 0.0
        %940 = vmatpush1.msra.mxu0 0.0
        %941 = vmatprep.subr.mxu0 0.0
        %942 = vmatpush1.msra.mxu0 0.0
        %943 = vmatprep.subr.mxu0 0.0
        %944 = vmatpush1.msra.mxu0 0.0
        %945 = vmatprep.subr.mxu0 0.0
        %946 = vmatpush1.msra.mxu0 0.0
        %947 = vmatprep.subr.mxu0 0.0
        %948 = vmatpush1.msra.mxu0 0.0
        %949 = vmatprep.subr.mxu0 0.0
        %950 = vmatpush1.msra.mxu0 0.0
        %951 = vmatprep.subr.mxu0 0.0
        %952 = vmatpush1.msra.mxu0 0.0
        %953 = vmatprep.subr.mxu0 0.0
        %954 = vmatpush1.msra.mxu0 0.0
        %955 = vmatprep.subr.mxu0 0.0
        %956 = vmatpush1.msra.mxu0 0.0
        %957 = vmatprep.subr.mxu0 0.0
        %958 = vmatpush1.msra.mxu0 0.0
        %959 = vmatprep.subr.mxu0 0.0
        %960 = vmatpush1.msra.mxu0 0.0
        %961 = vmatprep.subr.mxu0 0.0
        %962 = vmatpush1.msra.mxu0 0.0
        %963 = vmatprep.subr.mxu0 0.0
        %964 = vmatpush1.msra.mxu0 0.0
        %965 = vmatprep.subr.mxu0 0.0
        %966 = vmatpush1.msra.mxu0 0.0
        %967 = vmatprep.subr.mxu0 0.0
        %968 = vmatpush1.msra.mxu0 0.0
        %969 = vmatprep.subr.mxu0 0.0
        %970 = vmatpush1.msra.mxu0 0.0
        %971 = vmatprep.subr.mxu0 0.0
        %972 = vmatpush1.msra.mxu0 0.0
        %973 = vmatprep.subr.mxu0 0.0
        %974 = vmatpush1.msra.mxu0 0.0
        %975 = vmatprep.subr.mxu0 0.0
        %976 = vmatpush1.msra.mxu0 0.0
        %977 = vmatprep.subr.mxu0 0.0
        %978 = vmatpush1.msra.mxu0 0.0
        %979 = vmatprep.subr.mxu0 0.0
        %980 = vmatpush1.msra.mxu0 0.0
        %981 = vmatprep.subr.mxu0 0.0
        %982 = vmatpush1.msra.mxu0 0.0
        %983 = vmatprep.subr.mxu0 0.0
        %984 = vmatpush1.msra.mxu0 0.0
        %985 = vmatprep.subr.mxu0 0.0
        %986 = vmatpush1.msra.mxu0 0.0
        %987 = vmatprep.subr.mxu0 0.0
        %988 = vmatpush1.msra.mxu0 0.0
        %989 = vmatprep.subr.mxu0 0.0
        %990 = vmatpush1.msra.mxu0 0.0
        %991 = vmatprep.subr.mxu0 0.0
        %992 = vmatpush1.msra.mxu0 0.0
        %993 = vmatprep.subr.mxu0 0.0
        %994 = vmatpush1.msra.mxu0 0.0
        %995 = vmatprep.subr.mxu0 0.0
        %996 = vmatpush1.msra.mxu0 0.0
        %997 = vmatprep.subr.mxu0 0.0
        %998 = vmatpush1.msra.mxu0 0.0
        %999 = vmatprep.mubr.f32.mxu0 0.0
        %1000 = vmatmul.mubr.f32.gmra.mrb[0].mxu0 %v929
        %v1001 = vpop.f32.mrb[0].mxu0
        %v1002 = vadd.f32 0.0, %v1001
        %v1003 = vpop.f32.mrb[0].mxu0
        %1004 = vdwg.mxu0
        %v1005 = vmul.f32 %v1002, 0.5
        %v1006 = vtanh.pop %v1005
        %v1007 = vadd.f32 %v1006, 1.0
        %v1008 = vmul.f32 %v1007, 0.5
        %v1009 = vld [vmem:[%s438 + $0x20] sm:$0xf]
        %v1010 = vld [vmem:[%s438 + $0x28] sm:$0xf]
        %v1011 = vld [vmem:[%s10] sm:$0xff]
        %vm1012 = vcmask 31744
        %v1014 = vsel %vm1012, %v1011, 0
        %v1017 = vsel %vm455, %v1009, 0
        %v1020 = vsel %vm455, %v1010, 0
        %1022 = vmatprep.subr.mxu0 %v1020
        %1023 = vmatpush1.msra.mxu0 %v1017
        %1024 = vmatprep.subr.mxu0 0.0
        %1025 = vmatpush1.msra.mxu0 0.0
        %1026 = vmatprep.subr.mxu0 0.0
        %1027 = vmatpush1.msra.mxu0 0.0
        %1028 = vmatprep.subr.mxu0 0.0
        %1029 = vmatpush1.msra.mxu0 0.0
        %1030 = vmatprep.subr.mxu0 0.0
        %1031 = vmatpush1.msra.mxu0 0.0
        %1032 = vmatprep.subr.mxu0 0.0
        %1033 = vmatpush1.msra.mxu0 0.0
        %1034 = vmatprep.subr.mxu0 0.0
        %1035 = vmatpush1.msra.mxu0 0.0
        %1036 = vmatprep.subr.mxu0 0.0
        %1037 = vmatpush1.msra.mxu0 0.0
        %1038 = vmatprep.subr.mxu0 0.0
        %1039 = vmatpush1.msra.mxu0 0.0
        %1040 = vmatprep.subr.mxu0 0.0
        %1041 = vmatpush1.msra.mxu0 0.0
        %1042 = vmatprep.subr.mxu0 0.0
        %1043 = vmatpush1.msra.mxu0 0.0
        %1044 = vmatprep.subr.mxu0 0.0
        %1045 = vmatpush1.msra.mxu0 0.0
        %1046 = vmatprep.subr.mxu0 0.0
        %1047 = vmatpush1.msra.mxu0 0.0
        %1048 = vmatprep.subr.mxu0 0.0
        %1049 = vmatpush1.msra.mxu0 0.0
        %1050 = vmatprep.subr.mxu0 0.0
        %1051 = vmatpush1.msra.mxu0 0.0
        %1052 = vmatprep.subr.mxu0 0.0
        %1053 = vmatpush1.msra.mxu0 0.0
        %1054 = vmatprep.subr.mxu0 0.0
        %1055 = vmatpush1.msra.mxu0 0.0
        %1056 = vmatprep.subr.mxu0 0.0
        %1057 = vmatpush1.msra.mxu0 0.0
        %1058 = vmatprep.subr.mxu0 0.0
        %1059 = vmatpush1.msra.mxu0 0.0
        %1060 = vmatprep.subr.mxu0 0.0
        %1061 = vmatpush1.msra.mxu0 0.0
        %1062 = vmatprep.subr.mxu0 0.0
        %1063 = vmatpush1.msra.mxu0 0.0
        %1064 = vmatprep.subr.mxu0 0.0
        %1065 = vmatpush1.msra.mxu0 0.0
        %1066 = vmatprep.subr.mxu0 0.0
        %1067 = vmatpush1.msra.mxu0 0.0
        %1068 = vmatprep.subr.mxu0 0.0
        %1069 = vmatpush1.msra.mxu0 0.0
        %1070 = vmatprep.subr.mxu0 0.0
        %1071 = vmatpush1.msra.mxu0 0.0
        %1072 = vmatprep.subr.mxu0 0.0
        %1073 = vmatpush1.msra.mxu0 0.0
        %1074 = vmatprep.subr.mxu0 0.0
        %1075 = vmatpush1.msra.mxu0 0.0
        %1076 = vmatprep.subr.mxu0 0.0
        %1077 = vmatpush1.msra.mxu0 0.0
        %1078 = vmatprep.subr.mxu0 0.0
        %1079 = vmatpush1.msra.mxu0 0.0
        %1080 = vmatprep.subr.mxu0 0.0
        %1081 = vmatpush1.msra.mxu0 0.0
        %1082 = vmatprep.subr.mxu0 0.0
        %1083 = vmatpush1.msra.mxu0 0.0
        %1084 = vmatprep.subr.mxu0 0.0
        %1085 = vmatpush1.msra.mxu0 0.0
        %1086 = vmatprep.mubr.f32.mxu0 0.0
        %1087 = vmatmul.mubr.f32.gmra.mrb[0].mxu0 %v1014
        %v1088 = vpop.f32.mrb[0].mxu0
        %v1089 = vadd.f32 0.0, %v1088
        %v1090 = vpop.f32.mrb[0].mxu0
        %v1091 = vadd.f32 0.0, %v1090
        %1092 = vdwg.mxu0
        %v1093 = vld [vmem:[%s11] sm:$0xff]
        %1095 = vset.pattern.permute.xlu0 0
        %1096 = vperm.xlu0 %1095, %v1093
        %v1097 = vpop.permute.xlu0 %1096
        %v1099 = vmul.f32 %v1089, %v1097
        %v1100 = vmul.f32 %v1091, %v1097
        %v1101 = vld [vmem:[%s12] sm:$0xff]
        %1103 = vset.pattern.permute.xlu0 0
        %1104 = vperm.xlu0 %1103, %v1101
        %v1105 = vpop.permute.xlu0 %1104
        %v1107 = vadd.f32 %v1099, %v1105
        %v1108 = vadd.f32 %v1100, %v1105
        %1110 = vset.pattern.permute.xlu0 0
        %1111 = vperm.xlu0 %1110, %v1008
        %v1112 = vpop.permute.xlu0 %1111
        %v1114 = vmul.f32 %v832, %v1112
        %v1115 = vadd.f32 %v1114, %v1107
        %v1116 = vmax.f32 %v1115, 0.0
        %1117 = vst [vmem:[%s433] sm:$0xff] %v1116
        %1118 = vset.pattern.permute.xlu0 1
        %1119 = vperm.xlu0 %1118, %v1008
        %v1120 = vpop.permute.xlu0 %1119
        %v1122 = vmul.f32 %v833, %v1120
        %v1123 = vadd.f32 %v1122, %v1108
        %v1124 = vmax.f32 %v1123, 0.0
        %1125 = vst [vmem:[%s433 + $0x8] sm:$0xff] %v1124
        %s1126 = sand.u32 %s313, 1
        %s1127 = scalar_lea.sflag [#allocation5], %s1126
        %s1128 = sand.u32 %s313, 1
        %s1129 = smul.addr %s1128, 16
        %s1130 = scalar_lea.vmem [#allocation4], %s1129
        // Predicated region
        $region73: #{tpu_custom_call.1} parent=71 // pred_check
          %p1131 = pneg %p323
        $region74: #{tpu_custom_call.1} parent=71 // pred_check_branch
          %1133 = sbr.rel (%p1131) target = $region76
        $region75: #{tpu_custom_call.1} parent=71 // pred_region
          %s1135 = ssub.s32 256, 256
          %1136 = vsyncadd %s1127, %s1135
          %s1137 = smul.addr %s27, 2
          %s1138 = smul.addr %s1137, 128
          %s1139 = scalar_lea.hbm %s13, %s1138
          %s1141 = sshll.u32 %s1130, 4
          %s1142 = int_to_ptr.vmem [resolvable:$true] %s1141
          %1144 = dma.vmem_to_hbm [thread:$0]  %s1142, 256, %s1139, %s1127
        $region76: #{tpu_custom_call.1} parent=71 // pred_fallthru
          _
      $region72: #{tpu_custom_call.1} parent=5 // pred_fallthru
        _
      %p1145 = scmp.le.s32.totalorder 2, %s22
      // Predicated region
      $region77: #{tpu_custom_call.1} parent=5 // pred_check
        %p1146 = pneg %p1145
      $region78: #{tpu_custom_call.1} parent=5 // pred_check_branch
        %1148 = sbr.rel (%p1146) target = $region80
      $region79: #{tpu_custom_call.1} parent=5 // pred_region
        %s1149 = ssub.s32 %s22, 2
        // Predicated region
        $region81: #{tpu_custom_call.1} parent=79 // pred_check
          %p1150 = pneg %p329
        $region82: #{tpu_custom_call.1} parent=79 // pred_check_branch
          %1152 = sbr.rel (%p1150) target = $region84
        $region83: #{tpu_custom_call.1} parent=79 // pred_region
          %s1153 = sand.u32 %s314, 1
          %s1154 = scalar_lea.sflag [#allocation5], %s1153
          %s1155 = sand.u32 %s314, 1
          %s1156 = smul.addr %s1155, 16
          %s1157 = scalar_lea.vmem [#allocation4], %s1156
          %1158 = dma.done %s1154, 256
        $region84: #{tpu_custom_call.1} parent=79 // pred_fallthru
          _
      $region80: #{tpu_custom_call.1} parent=5 // pred_fallthru
        _
    $region6: #{tpu_custom_call.1} parent=1 // loop_footer
      %s26 = sadd.s32 1, %s22
    $region7: #{tpu_custom_call.1} parent=1 // loop_footer_branch
      %21 = sbr.rel target = $region3
    $region8: #{tpu_custom_call.1} parent=1 // loop_exit
      _
    %1159 = vsyncpa [#allocation5], 1
    %s1160 = scalar_lea.sflag [#allocation5], 1
    %1161 = vsyncpa %s1160, 1

</llo_original>
